<compile_context>
chip_gen: v7x
topology: tpu7x:2x2x1
jax: 0.10.0
libtpu: 0.0.40
codegen_flags: <defaults>
</compile_context>

<pallas_src>
import functools

import jax
import jax.numpy as jnp
from jax.experimental import pallas as pl
from jax.experimental.pallas import tpu as pltpu


VMEM_LIMIT_BYTES = 32 * 1024 * 1024  # within scoped defaults on v6e/v7x, raises v5e


# ----------------------------------------------------------------------------
# Pallas kernel 1: fused (1x1 -> 3x3) conv, channel-major, no im2col.
#   input  xp : (b, c, h*w + 2*(w+1))  zero-padded flat feature map
#   weight wt : (9, cout, c)           taps t = dy*3 + dx of the fused kernel
#   output    : (b, cout, h*w)
# ----------------------------------------------------------------------------
def _fused_conv3x3_kernel(xp_ref, w_ref, out_ref, *, h, w, hw):
    xp = xp_ref[0].astype(jnp.bfloat16)                       # (c, L)
    cout = out_ref.shape[1]

    # column index of each output pixel (for left/right edge masking)
    col = jax.lax.broadcasted_iota(jnp.int32, (1, hw), 1) % w
    not_left = col != 0
    not_right = col != (w - 1)

    acc = jnp.zeros((cout, hw), jnp.float32)
    for dy in range(3):
        for dx in range(3):
            off = dy * w + dx
            tap = xp[:, off: off + hw]                        # (c, hw) shifted window
            if dx == 0:
                tap = jnp.where(not_left, tap, jnp.zeros_like(tap))
            elif dx == 2:
                tap = jnp.where(not_right, tap, jnp.zeros_like(tap))
            wt = w_ref[dy * 3 + dx].astype(jnp.bfloat16)      # (cout, c)
            acc = acc + jax.lax.dot_general(
                wt, tap, (((1,), (0,)), ((), ())),
                preferred_element_type=jnp.float32)
    out_ref[0] = acc.astype(out_ref.dtype)


def fused_conv3x3(x_pad_flat, w_taps, *, h, w, hw, cout):
    b, c, L = x_pad_flat.shape
    kernel = functools.partial(_fused_conv3x3_kernel, h=h, w=w, hw=hw)
    return pl.pallas_call(
        kernel,
        out_shape=jax.ShapeDtypeStruct((b, cout, hw), jnp.float32),
        grid_spec=pl.GridSpec(
            grid=(b,),
            in_specs=[
                pl.BlockSpec((1, c, L), lambda i: (i, 0, 0)),
                pl.BlockSpec((9, cout, c), lambda i: (0, 0, 0)),
            ],
            out_specs=pl.BlockSpec((1, cout, hw), lambda i: (i, 0, 0)),
        ),
        compiler_params=pltpu.CompilerParams(
            dimension_semantics=("parallel",),
            vmem_limit_bytes=VMEM_LIMIT_BYTES),
    )(x_pad_flat, w_taps)


# ----------------------------------------------------------------------------
# Pallas kernel 2: per-batch channel attention over ALL heads + fused project_out
#   normalize(q), normalize(k) over hw; attn = softmax(q @ k^T * temp);
#   out = proj_w @ concat_heads(attn @ v)   (projection folded per head)
# ----------------------------------------------------------------------------
def _mdta_attn_proj_kernel(temp_ref, q_ref, kv_ref, pw_ref,
                           out_ref, qn_ref, attn_ref, *, num_heads, d):
    c = num_heads * d
    q = q_ref[0].astype(jnp.float32)        # (c, hw)
    kvv = kv_ref[0].astype(jnp.float32)     # (2c, hw)
    k = kvv[0:c]
    v = kvv[c:2 * c]

    eps = 1e-12  # F.normalize default
    qn = q / jnp.maximum(jnp.sqrt(jnp.sum(q * q, axis=-1, keepdims=True)), eps)
    kn = k / jnp.maximum(jnp.sqrt(jnp.sum(k * k, axis=-1, keepdims=True)), eps)
    qn_ref[0] = qn.astype(qn_ref.dtype)

    qnb = qn.astype(jnp.bfloat16)
    knb = kn.astype(jnp.bfloat16)
    vb = v.astype(jnp.bfloat16)
    pwb = pw_ref[...].astype(jnp.bfloat16)  # (c, c)

    hw = q.shape[-1]
    proj = jnp.zeros((c, hw), jnp.float32)
    for hh in range(num_heads):
        lo, hi = hh * d, (hh + 1) * d
        # scores: contract over hw directly, no explicit transpose
        s = jax.lax.dot_general(
            qnb[lo:hi], knb[lo:hi], (((1,), (1,)), ((), ())),
            preferred_element_type=jnp.float32) * temp_ref[hh]      # (d, d)
        s = s - jnp.max(s, axis=-1, keepdims=True)
        e = jnp.exp(s)
        attn = e * pl.reciprocal(jnp.sum(e, axis=-1, keepdims=True), approx=True)
        attn_ref[0, hh] = attn.astype(attn_ref.dtype)
        out_h = jax.lax.dot_general(
            attn.astype(jnp.bfloat16), vb[lo:hi], (((1,), (0,)), ((), ())),
            preferred_element_type=jnp.float32)                     # (d, hw)
        # fused project_out: proj += proj_w[:, head_slice] @ out_h
        proj = proj + jax.lax.dot_general(
            pwb[:, lo:hi], out_h.astype(jnp.bfloat16), (((1,), (0,)), ((), ())),
            preferred_element_type=jnp.float32)
    out_ref[0] = proj.astype(out_ref.dtype)


def mdta_attention_proj(q_flat, kv_flat, temperature, proj_w, *, num_heads):
    b, c, hw = q_flat.shape
    d = c // num_heads
    kernel = functools.partial(_mdta_attn_proj_kernel, num_heads=num_heads, d=d)
    return pl.pallas_call(
        kernel,
        out_shape=(
            jax.ShapeDtypeStruct((b, c, hw), jnp.float32),            # projected out
            jax.ShapeDtypeStruct((b, c, hw), jnp.float32),            # normalized q
            jax.ShapeDtypeStruct((b, num_heads, d, d), jnp.float32),  # attn
        ),
        grid_spec=pl.GridSpec(
            grid=(b,),
            in_specs=[
                pl.BlockSpec(memory_space=pltpu.MemorySpace.SMEM),    # temperature (H,)
                pl.BlockSpec((1, c, hw), lambda i: (i, 0, 0)),        # q
                pl.BlockSpec((1, 2 * c, hw), lambda i: (i, 0, 0)),    # kv
                pl.BlockSpec((c, c), lambda i: (0, 0)),               # proj_w
            ],
            out_specs=(
                pl.BlockSpec((1, c, hw), lambda i: (i, 0, 0)),
                pl.BlockSpec((1, c, hw), lambda i: (i, 0, 0)),
                pl.BlockSpec((1, num_heads, d, d), lambda i: (i, 0, 0, 0)),
            ),
        ),
        compiler_params=pltpu.CompilerParams(
            dimension_semantics=("parallel",),
            vmem_limit_bytes=VMEM_LIMIT_BYTES),
    )(temperature, q_flat, kv_flat, proj_w)


# ----------------------------------------------------------------------------
# MDTA forward
# ----------------------------------------------------------------------------
@functools.partial(jax.jit, static_argnames=("num_heads",))
def mdta_forward(params, x, q, *, num_heads):
    b, c, h, w = x.shape
    d = c // num_heads
    hw = h * w

    # Fold kv 1x1 conv into the 3x3 regular conv (deform offsets are 0): exact.
    kv_w2d = params["kv_w"][:, :, 0, 0]                                  # (2c, c)
    w_fused = jnp.einsum("omyx,mi->oiyx", params["reg_w"], kv_w2d)       # (2c, c, 3, 3)
    w_taps = jnp.transpose(w_fused, (2, 3, 0, 1)).reshape(9, 2 * c, c)   # (9, 2c, c)

    # Channel-major flat layout, zero-padded by (w+1) along hw for the 3x3 taps.
    x_flat = x.reshape(b, c, hw)
    x_pad = jnp.pad(x_flat, ((0, 0), (0, 0), (w + 1, w + 1)))

    kv = fused_conv3x3(x_pad, w_taps, h=h, w=w, hw=hw, cout=2 * c)       # (b, 2c, hw)

    q_flat = q.reshape(b, c, hw)
    proj_w = params["proj_w"][:, :, 0, 0]                                # (c, c)
    temp = params["temperature"].reshape(num_heads)

    out_flat, qn_flat, attn = mdta_attention_proj(
        q_flat, kv, temp, proj_w, num_heads=num_heads)

    out = out_flat.reshape(b, c, h, w)
    q_norm = qn_flat.reshape(b, num_heads, d, hw)
    return out, q_norm, attn


# ----------------------------------------------------------------------------
# Pure-JAX reference (for correctness check) -- uses the UNfused convs in f32.
# ----------------------------------------------------------------------------
def mdta_reference(params, x, q, num_heads):
    b, c, h, w = x.shape
    d = c // num_heads
    dn = ("NCHW", "OIHW", "NCHW")
    kv = jax.lax.conv_general_dilated(x, params["kv_w"], (1, 1), "VALID",
                                      dimension_numbers=dn)
    kv = jax.lax.conv_general_dilated(kv, params["reg_w"], (1, 1),
                                      [(1, 1), (1, 1)], dimension_numbers=dn)
    k, v = jnp.split(kv, 2, axis=1)
    qr = q.reshape(b, num_heads, d, h * w)
    kr = k.reshape(b, num_heads, d, h * w)
    vr = v.reshape(b, num_heads, d, h * w)
    eps = 1e-12
    qn = qr / jnp.maximum(jnp.linalg.norm(qr, axis=-1, keepdims=True), eps)
    kn = kr / jnp.maximum(jnp.linalg.norm(kr, axis=-1, keepdims=True), eps)
    s = jnp.einsum("bhik,bhjk->bhij", qn, kn) * params["temperature"]
    attn = jax.nn.softmax(s, axis=-1)
    o = jnp.einsum("bhij,bhjk->bhik", attn, vr).reshape(b, c, h, w)
    out = jax.lax.conv_general_dilated(o, params["proj_w"], (1, 1), "VALID",
                                       dimension_numbers=dn)
    return out, qn, attn


# ----------------------------------------------------------------------------
# main
# ----------------------------------------------------------------------------
if __name__ == "__main__":
    B, C, Hs, Ws = 2, 4, 16, 16
    NUM_HEADS = 2

    key = jax.random.PRNGKey(0)
    k_kv, k_reg, k_proj, k_x, k_q = jax.random.split(key, 5)

    params = {
        # nn.Conv2d(C, 2C, 1, bias=False)
        "kv_w": 0.2 * jax.random.normal(k_kv, (2 * C, C, 1, 1), jnp.float32),
        # DeformableConv2d(2C, 2C).regular_conv weights (3x3, bias=False);
        # offset_conv / modulator_conv are constant-zero per __init__ (no effect).
        "reg_w": 0.1 * jax.random.normal(k_reg, (2 * C, 2 * C, 3, 3), jnp.float32),
        # nn.Conv2d(C, C, 1, bias=False)
        "proj_w": 0.2 * jax.random.normal(k_proj, (C, C, 1, 1), jnp.float32),
        # nn.Parameter(torch.ones(1, num_heads, 1, 1))
        "temperature": jnp.ones((1, NUM_HEADS, 1, 1), jnp.float32),
    }

    x = jax.random.normal(k_x, (B, C, Hs, Ws), jnp.float32)
    q = jax.random.normal(k_q, (B, C, Hs, Ws), jnp.float32)

    out, q_norm, attn = mdta_forward(params, x, q, num_heads=NUM_HEADS)
    jax.block_until_ready((out, q_norm, attn))

    out_ref, q_ref, attn_ref = mdta_reference(params, x, q, NUM_HEADS)

    def rel_err(a, b):
        return float(jnp.max(jnp.abs(a - b)) / (jnp.max(jnp.abs(b)) + 1e-8))

    assert out.shape == (B, C, Hs, Ws)
    assert q_norm.shape == (B, NUM_HEADS, C // NUM_HEADS, Hs * Ws)
    assert attn.shape == (B, NUM_HEADS, C // NUM_HEADS, C // NUM_HEADS)
    assert rel_err(out, out_ref) < 5e-2
    assert rel_err(q_norm, q_ref) < 5e-2
    assert rel_err(attn, attn_ref) < 5e-2

    print("KERNEL_OK")
</pallas_src>

<mosaic_0001>
module attributes {stable_mosaic.version = 11 : i64} {
  func.func @_fused_conv3x3_kernel(%arg0: i32, %arg1: memref<1x4x290xf32, #tpu.memory_space<vmem>>, %arg2: memref<9x8x4xf32, #tpu.memory_space<vmem>>, %arg3: memref<1x8x256xf32, #tpu.memory_space<vmem>>) attributes {dimension_semantics = [#tpu.dimension_semantics<parallel>], iteration_bounds = array<i64: 2>, scalar_prefetch = 0 : i64, scratch_operands = 0 : i64, tpu.core_type = #tpu.core_type<tc>, window_params = [{transform_indices = @transform_0, window_bounds = array<i64: 1, 4, 290>}, {pipeline_mode = #tpu.pipeline_mode<synchronous>, transform_indices = @transform_1, window_bounds = array<i64: 9, 8, 4>}, {transform_indices = @transform_2, window_bounds = array<i64: 1, 8, 256>}]} {
    %c0 = arith.constant 0 : index
    %c0_0 = arith.constant 0 : index
    %c0_1 = arith.constant 0 : index
    %0 = vector.load %arg1[%c0, %c0_0, %c0_1] : memref<1x4x290xf32, #tpu.memory_space<vmem>>, vector<1x4x290xf32>
    %1 = vector.shape_cast %0 : vector<1x4x290xf32> to vector<4x290xf32>
    %2 = arith.truncf %1 : vector<4x290xf32> to vector<4x290xbf16>
    %3 = tpu.iota {dimensions = array<i32: 1>} : vector<1x256xi32>
    %c16_i32 = arith.constant 16 : i32
    %c0_i32 = arith.constant 0 : i32
    %4 = arith.cmpi eq, %c16_i32, %c0_i32 : i32
    %c1_i32 = arith.constant 1 : i32
    %5 = arith.select %4, %c1_i32, %c16_i32 : i32
    %6 = vector.broadcast %5 : i32 to vector<1x256xi32>
    %7 = arith.remsi %3, %6 : vector<1x256xi32>
    %c0_i32_2 = arith.constant 0 : i32
    %8 = vector.broadcast %c0_i32_2 : i32 to vector<1x256xi32>
    %9 = arith.cmpi ne, %7, %8 : vector<1x256xi32>
    %c0_i32_3 = arith.constant 0 : i32
    %10 = vector.broadcast %c0_i32_3 : i32 to vector<1x256xi32>
    %11 = arith.cmpi slt, %7, %10 : vector<1x256xi32>
    %c0_i32_4 = arith.constant 0 : i32
    %12 = arith.cmpi slt, %5, %c0_i32_4 : i32
    %13 = vector.broadcast %12 : i1 to vector<1x256xi1>
    %14 = vector.broadcast %13 : vector<1x256xi1> to vector<1x256xi1>
    %15 = arith.xori %11, %14 : vector<1x256xi1>
    %16 = arith.andi %15, %9 : vector<1x256xi1>
    %17 = vector.broadcast %5 : i32 to vector<1x256xi32>
    %18 = arith.addi %7, %17 : vector<1x256xi32>
    %19 = arith.select %16, %18, %7 : vector<1x256xi1>, vector<1x256xi32>
    %c0_i32_5 = arith.constant 0 : i32
    %20 = vector.broadcast %c0_i32_5 : i32 to vector<1x256xi32>
    %21 = arith.cmpi ne, %19, %20 : vector<1x256xi32>
    %c15_i32 = arith.constant 15 : i32
    %22 = vector.broadcast %c15_i32 : i32 to vector<1x256xi32>
    %23 = arith.cmpi ne, %19, %22 : vector<1x256xi32>
    %cst = arith.constant 0.000000e+00 : f32
    %24 = vector.broadcast %cst : f32 to vector<8x256xf32>
    %25 = vector.extract_strided_slice %2 {offsets = [0, 0], sizes = [4, 256], strides = [1, 1]} : vector<4x290xbf16> to vector<4x256xbf16>
    %cst_6 = arith.constant 0.000000e+00 : bf16
    %26 = vector.broadcast %cst_6 : bf16 to vector<4x256xbf16>
    %27 = vector.shape_cast %21 : vector<1x256xi1> to vector<1x256xi1>
    %28 = vector.broadcast %27 : vector<1x256xi1> to vector<4x256xi1>
    %29 = arith.select %28, %25, %26 : vector<4x256xi1>, vector<4x256xbf16>
    %c0_7 = arith.constant 0 : index
    %c0_8 = arith.constant 0 : index
    %c0_9 = arith.constant 0 : index
    %30 = vector.load %arg2[%c0_7, %c0_8, %c0_9] : memref<9x8x4xf32, #tpu.memory_space<vmem>>, vector<1x8x4xf32>
    %31 = vector.shape_cast %30 : vector<1x8x4xf32> to vector<8x4xf32>
    %32 = arith.truncf %31 : vector<8x4xf32> to vector<8x4xbf16>
    %cst_10 = arith.constant dense<0.000000e+00> : vector<8x256xf32>
    %33 = tpu.matmul %32, %29, %cst_10 {dimension_numbers = #tpu.dot_dimension_numbers<[1], [0], [0], [1], [0, 0, 1, 1], [], []>} : vector<8x4xbf16>, vector<4x256xbf16>, vector<8x256xf32> -> vector<8x256xf32>
    %34 = arith.addf %24, %33 : vector<8x256xf32>
    %35 = vector.extract_strided_slice %2 {offsets = [0, 1], sizes = [4, 256], strides = [1, 1]} : vector<4x290xbf16> to vector<4x256xbf16>
    %c1 = arith.constant 1 : index
    %c0_11 = arith.constant 0 : index
    %c0_12 = arith.constant 0 : index
    %36 = vector.load %arg2[%c1, %c0_11, %c0_12] : memref<9x8x4xf32, #tpu.memory_space<vmem>>, vector<1x8x4xf32>
    %37 = vector.shape_cast %36 : vector<1x8x4xf32> to vector<8x4xf32>
    %38 = arith.truncf %37 : vector<8x4xf32> to vector<8x4xbf16>
    %cst_13 = arith.constant dense<0.000000e+00> : vector<8x256xf32>
    %39 = tpu.matmul %38, %35, %cst_13 {dimension_numbers = #tpu.dot_dimension_numbers<[1], [0], [0], [1], [0, 0, 1, 1], [], []>} : vector<8x4xbf16>, vector<4x256xbf16>, vector<8x256xf32> -> vector<8x256xf32>
    %40 = arith.addf %34, %39 : vector<8x256xf32>
    %41 = vector.extract_strided_slice %2 {offsets = [0, 2], sizes = [4, 256], strides = [1, 1]} : vector<4x290xbf16> to vector<4x256xbf16>
    %cst_14 = arith.constant 0.000000e+00 : bf16
    %42 = vector.broadcast %cst_14 : bf16 to vector<4x256xbf16>
    %43 = vector.shape_cast %23 : vector<1x256xi1> to vector<1x256xi1>
    %44 = vector.broadcast %43 : vector<1x256xi1> to vector<4x256xi1>
    %45 = arith.select %44, %41, %42 : vector<4x256xi1>, vector<4x256xbf16>
    %c2 = arith.constant 2 : index
    %c0_15 = arith.constant 0 : index
    %c0_16 = arith.constant 0 : index
    %46 = vector.load %arg2[%c2, %c0_15, %c0_16] : memref<9x8x4xf32, #tpu.memory_space<vmem>>, vector<1x8x4xf32>
    %47 = vector.shape_cast %46 : vector<1x8x4xf32> to vector<8x4xf32>
    %48 = arith.truncf %47 : vector<8x4xf32> to vector<8x4xbf16>
    %cst_17 = arith.constant dense<0.000000e+00> : vector<8x256xf32>
    %49 = tpu.matmul %48, %45, %cst_17 {dimension_numbers = #tpu.dot_dimension_numbers<[1], [0], [0], [1], [0, 0, 1, 1], [], []>} : vector<8x4xbf16>, vector<4x256xbf16>, vector<8x256xf32> -> vector<8x256xf32>
    %50 = arith.addf %40, %49 : vector<8x256xf32>
    %51 = vector.extract_strided_slice %2 {offsets = [0, 16], sizes = [4, 256], strides = [1, 1]} : vector<4x290xbf16> to vector<4x256xbf16>
    %cst_18 = arith.constant 0.000000e+00 : bf16
    %52 = vector.broadcast %cst_18 : bf16 to vector<4x256xbf16>
    %53 = vector.shape_cast %21 : vector<1x256xi1> to vector<1x256xi1>
    %54 = vector.broadcast %53 : vector<1x256xi1> to vector<4x256xi1>
    %55 = arith.select %54, %51, %52 : vector<4x256xi1>, vector<4x256xbf16>
    %c3 = arith.constant 3 : index
    %c0_19 = arith.constant 0 : index
    %c0_20 = arith.constant 0 : index
    %56 = vector.load %arg2[%c3, %c0_19, %c0_20] : memref<9x8x4xf32, #tpu.memory_space<vmem>>, vector<1x8x4xf32>
    %57 = vector.shape_cast %56 : vector<1x8x4xf32> to vector<8x4xf32>
    %58 = arith.truncf %57 : vector<8x4xf32> to vector<8x4xbf16>
    %cst_21 = arith.constant dense<0.000000e+00> : vector<8x256xf32>
    %59 = tpu.matmul %58, %55, %cst_21 {dimension_numbers = #tpu.dot_dimension_numbers<[1], [0], [0], [1], [0, 0, 1, 1], [], []>} : vector<8x4xbf16>, vector<4x256xbf16>, vector<8x256xf32> -> vector<8x256xf32>
    %60 = arith.addf %50, %59 : vector<8x256xf32>
    %61 = vector.extract_strided_slice %2 {offsets = [0, 17], sizes = [4, 256], strides = [1, 1]} : vector<4x290xbf16> to vector<4x256xbf16>
    %c4 = arith.constant 4 : index
    %c0_22 = arith.constant 0 : index
    %c0_23 = arith.constant 0 : index
    %62 = vector.load %arg2[%c4, %c0_22, %c0_23] : memref<9x8x4xf32, #tpu.memory_space<vmem>>, vector<1x8x4xf32>
    %63 = vector.shape_cast %62 : vector<1x8x4xf32> to vector<8x4xf32>
    %64 = arith.truncf %63 : vector<8x4xf32> to vector<8x4xbf16>
    %cst_24 = arith.constant dense<0.000000e+00> : vector<8x256xf32>
    %65 = tpu.matmul %64, %61, %cst_24 {dimension_numbers = #tpu.dot_dimension_numbers<[1], [0], [0], [1], [0, 0, 1, 1], [], []>} : vector<8x4xbf16>, vector<4x256xbf16>, vector<8x256xf32> -> vector<8x256xf32>
    %66 = arith.addf %60, %65 : vector<8x256xf32>
    %67 = vector.extract_strided_slice %2 {offsets = [0, 18], sizes = [4, 256], strides = [1, 1]} : vector<4x290xbf16> to vector<4x256xbf16>
    %cst_25 = arith.constant 0.000000e+00 : bf16
    %68 = vector.broadcast %cst_25 : bf16 to vector<4x256xbf16>
    %69 = vector.shape_cast %23 : vector<1x256xi1> to vector<1x256xi1>
    %70 = vector.broadcast %69 : vector<1x256xi1> to vector<4x256xi1>
    %71 = arith.select %70, %67, %68 : vector<4x256xi1>, vector<4x256xbf16>
    %c5 = arith.constant 5 : index
    %c0_26 = arith.constant 0 : index
    %c0_27 = arith.constant 0 : index
    %72 = vector.load %arg2[%c5, %c0_26, %c0_27] : memref<9x8x4xf32, #tpu.memory_space<vmem>>, vector<1x8x4xf32>
    %73 = vector.shape_cast %72 : vector<1x8x4xf32> to vector<8x4xf32>
    %74 = arith.truncf %73 : vector<8x4xf32> to vector<8x4xbf16>
    %cst_28 = arith.constant dense<0.000000e+00> : vector<8x256xf32>
    %75 = tpu.matmul %74, %71, %cst_28 {dimension_numbers = #tpu.dot_dimension_numbers<[1], [0], [0], [1], [0, 0, 1, 1], [], []>} : vector<8x4xbf16>, vector<4x256xbf16>, vector<8x256xf32> -> vector<8x256xf32>
    %76 = arith.addf %66, %75 : vector<8x256xf32>
    %77 = vector.extract_strided_slice %2 {offsets = [0, 32], sizes = [4, 256], strides = [1, 1]} : vector<4x290xbf16> to vector<4x256xbf16>
    %cst_29 = arith.constant 0.000000e+00 : bf16
    %78 = vector.broadcast %cst_29 : bf16 to vector<4x256xbf16>
    %79 = vector.shape_cast %21 : vector<1x256xi1> to vector<1x256xi1>
    %80 = vector.broadcast %79 : vector<1x256xi1> to vector<4x256xi1>
    %81 = arith.select %80, %77, %78 : vector<4x256xi1>, vector<4x256xbf16>
    %c6 = arith.constant 6 : index
    %c0_30 = arith.constant 0 : index
    %c0_31 = arith.constant 0 : index
    %82 = vector.load %arg2[%c6, %c0_30, %c0_31] : memref<9x8x4xf32, #tpu.memory_space<vmem>>, vector<1x8x4xf32>
    %83 = vector.shape_cast %82 : vector<1x8x4xf32> to vector<8x4xf32>
    %84 = arith.truncf %83 : vector<8x4xf32> to vector<8x4xbf16>
    %cst_32 = arith.constant dense<0.000000e+00> : vector<8x256xf32>
    %85 = tpu.matmul %84, %81, %cst_32 {dimension_numbers = #tpu.dot_dimension_numbers<[1], [0], [0], [1], [0, 0, 1, 1], [], []>} : vector<8x4xbf16>, vector<4x256xbf16>, vector<8x256xf32> -> vector<8x256xf32>
    %86 = arith.addf %76, %85 : vector<8x256xf32>
    %87 = vector.extract_strided_slice %2 {offsets = [0, 33], sizes = [4, 256], strides = [1, 1]} : vector<4x290xbf16> to vector<4x256xbf16>
    %c7 = arith.constant 7 : index
    %c0_33 = arith.constant 0 : index
    %c0_34 = arith.constant 0 : index
    %88 = vector.load %arg2[%c7, %c0_33, %c0_34] : memref<9x8x4xf32, #tpu.memory_space<vmem>>, vector<1x8x4xf32>
    %89 = vector.shape_cast %88 : vector<1x8x4xf32> to vector<8x4xf32>
    %90 = arith.truncf %89 : vector<8x4xf32> to vector<8x4xbf16>
    %cst_35 = arith.constant dense<0.000000e+00> : vector<8x256xf32>
    %91 = tpu.matmul %90, %87, %cst_35 {dimension_numbers = #tpu.dot_dimension_numbers<[1], [0], [0], [1], [0, 0, 1, 1], [], []>} : vector<8x4xbf16>, vector<4x256xbf16>, vector<8x256xf32> -> vector<8x256xf32>
    %92 = arith.addf %86, %91 : vector<8x256xf32>
    %93 = vector.extract_strided_slice %2 {offsets = [0, 34], sizes = [4, 256], strides = [1, 1]} : vector<4x290xbf16> to vector<4x256xbf16>
    %cst_36 = arith.constant 0.000000e+00 : bf16
    %94 = vector.broadcast %cst_36 : bf16 to vector<4x256xbf16>
    %95 = vector.shape_cast %23 : vector<1x256xi1> to vector<1x256xi1>
    %96 = vector.broadcast %95 : vector<1x256xi1> to vector<4x256xi1>
    %97 = arith.select %96, %93, %94 : vector<4x256xi1>, vector<4x256xbf16>
    %c8 = arith.constant 8 : index
    %c0_37 = arith.constant 0 : index
    %c0_38 = arith.constant 0 : index
    %98 = vector.load %arg2[%c8, %c0_37, %c0_38] : memref<9x8x4xf32, #tpu.memory_space<vmem>>, vector<1x8x4xf32>
    %99 = vector.shape_cast %98 : vector<1x8x4xf32> to vector<8x4xf32>
    %100 = arith.truncf %99 : vector<8x4xf32> to vector<8x4xbf16>
    %cst_39 = arith.constant dense<0.000000e+00> : vector<8x256xf32>
    %101 = tpu.matmul %100, %97, %cst_39 {dimension_numbers = #tpu.dot_dimension_numbers<[1], [0], [0], [1], [0, 0, 1, 1], [], []>} : vector<8x4xbf16>, vector<4x256xbf16>, vector<8x256xf32> -> vector<8x256xf32>
    %102 = arith.addf %92, %101 : vector<8x256xf32>
    %c0_40 = arith.constant 0 : index
    %c0_41 = arith.constant 0 : index
    %c0_42 = arith.constant 0 : index
    %103 = vector.load %arg3[%c0_40, %c0_41, %c0_42] : memref<1x8x256xf32, #tpu.memory_space<vmem>>, vector<1x8x256xf32>
    %104 = vector.shape_cast %103 : vector<1x8x256xf32> to vector<8x256xf32>
    %105 = vector.shape_cast %102 : vector<8x256xf32> to vector<1x8x256xf32>
    tpu.vector_store %arg3[%c0_40, %c0_41, %c0_42], %105 {strides = array<i32>} : memref<1x8x256xf32, #tpu.memory_space<vmem>>, vector<1x8x256xf32>,
    return
  }
  func.func @transform_0(%arg0: i32) -> (i32, i32, i32) {
    %c0_i32 = arith.constant 0 : i32
    %c0_i32_0 = arith.constant 0 : i32
    %c0_i32_1 = arith.constant 0 : i32
    return %arg0, %c0_i32, %c0_i32_0 : i32, i32, i32
  }
  func.func @transform_1(%arg0: i32) -> (i32, i32, i32) {
    %c0_i32 = arith.constant 0 : i32
    %c0_i32_0 = arith.constant 0 : i32
    %c0_i32_1 = arith.constant 0 : i32
    %c0_i32_2 = arith.constant 0 : i32
    return %c0_i32, %c0_i32_0, %c0_i32_1 : i32, i32, i32
  }
  func.func @transform_2(%arg0: i32) -> (i32, i32, i32) {
    %c0_i32 = arith.constant 0 : i32
    %c0_i32_0 = arith.constant 0 : i32
    %c0_i32_1 = arith.constant 0 : i32
    return %arg0, %c0_i32, %c0_i32_0 : i32, i32, i32
  }
}

module attributes {stable_mosaic.version = 11 : i64} {
  func.func @_mdta_attn_proj_kernel(%arg0: i32, %arg1: memref<2xf32, #tpu.memory_space<smem>>, %arg2: memref<1x4x256xf32, #tpu.memory_space<vmem>>, %arg3: memref<1x8x256xf32, #tpu.memory_space<vmem>>, %arg4: memref<4x4xf32, #tpu.memory_space<vmem>>, %arg5: memref<1x4x256xf32, #tpu.memory_space<vmem>>, %arg6: memref<1x4x256xf32, #tpu.memory_space<vmem>>, %arg7: memref<1x2x2x2xf32, #tpu.memory_space<vmem>>) attributes {dimension_semantics = [#tpu.dimension_semantics<parallel>], iteration_bounds = array<i64: 2>, scalar_prefetch = 0 : i64, scratch_operands = 0 : i64, tpu.core_type = #tpu.core_type<tc>, window_params = [{transform_indices = @transform_0, window_bounds = array<i64: 2>}, {transform_indices = @transform_1, window_bounds = array<i64: 1, 4, 256>}, {transform_indices = @transform_2, window_bounds = array<i64: 1, 8, 256>}, {pipeline_mode = #tpu.pipeline_mode<synchronous>, transform_indices = @transform_3, window_bounds = array<i64: 4, 4>}, {transform_indices = @transform_4, window_bounds = array<i64: 1, 4, 256>}, {transform_indices = @transform_5, window_bounds = array<i64: 1, 4, 256>}, {transform_indices = @transform_6, window_bounds = array<i64: 1, 2, 2, 2>}]} {
    %c0 = arith.constant 0 : index
    %c0_0 = arith.constant 0 : index
    %c0_1 = arith.constant 0 : index
    %0 = vector.load %arg2[%c0, %c0_0, %c0_1] : memref<1x4x256xf32, #tpu.memory_space<vmem>>, vector<1x4x256xf32>
    %1 = vector.shape_cast %0 : vector<1x4x256xf32> to vector<4x256xf32>
    %c0_2 = arith.constant 0 : index
    %c0_3 = arith.constant 0 : index
    %c0_4 = arith.constant 0 : index
    %2 = vector.load %arg3[%c0_2, %c0_3, %c0_4] : memref<1x8x256xf32, #tpu.memory_space<vmem>>, vector<1x8x256xf32>
    %3 = vector.shape_cast %2 : vector<1x8x256xf32> to vector<8x256xf32>
    %4 = vector.extract_strided_slice %3 {offsets = [0, 0], sizes = [4, 256], strides = [1, 1]} : vector<8x256xf32> to vector<4x256xf32>
    %5 = vector.extract_strided_slice %3 {offsets = [4, 0], sizes = [4, 256], strides = [1, 1]} : vector<8x256xf32> to vector<4x256xf32>
    %6 = arith.mulf %1, %1 : vector<4x256xf32>
    %cst = arith.constant dense<0.000000e+00> : vector<4xf32>
    %7 = vector.multi_reduction <add>, %6, %cst [1] : vector<4x256xf32> to vector<4xf32>
    %8 = vector.shape_cast %7 : vector<4xf32> to vector<4x1xf32>
    %9 = math.sqrt %8 : vector<4x1xf32>
    %cst_5 = arith.constant 9.99999996E-13 : f32
    %10 = vector.broadcast %cst_5 : f32 to vector<4x1xf32>
    %11 = arith.maximumf %9, %10 : vector<4x1xf32>
    %12 = vector.broadcast %11 : vector<4x1xf32> to vector<4x256xf32>
    %13 = arith.divf %1, %12 : vector<4x256xf32>
    %14 = arith.mulf %4, %4 : vector<4x256xf32>
    %cst_6 = arith.constant dense<0.000000e+00> : vector<4xf32>
    %15 = vector.multi_reduction <add>, %14, %cst_6 [1] : vector<4x256xf32> to vector<4xf32>
    %16 = vector.shape_cast %15 : vector<4xf32> to vector<4x1xf32>
    %17 = math.sqrt %16 : vector<4x1xf32>
    %cst_7 = arith.constant 9.99999996E-13 : f32
    %18 = vector.broadcast %cst_7 : f32 to vector<4x1xf32>
    %19 = arith.maximumf %17, %18 : vector<4x1xf32>
    %20 = vector.broadcast %19 : vector<4x1xf32> to vector<4x256xf32>
    %21 = arith.divf %4, %20 : vector<4x256xf32>
    %c0_8 = arith.constant 0 : index
    %c0_9 = arith.constant 0 : index
    %c0_10 = arith.constant 0 : index
    %22 = vector.load %arg6[%c0_8, %c0_9, %c0_10] : memref<1x4x256xf32, #tpu.memory_space<vmem>>, vector<1x4x256xf32>
    %23 = vector.shape_cast %22 : vector<1x4x256xf32> to vector<4x256xf32>
    %24 = vector.shape_cast %13 : vector<4x256xf32> to vector<1x4x256xf32>
    tpu.vector_store %arg6[%c0_8, %c0_9, %c0_10], %24 {strides = array<i32>} : memref<1x4x256xf32, #tpu.memory_space<vmem>>, vector<1x4x256xf32>,
    %25 = arith.truncf %13 : vector<4x256xf32> to vector<4x256xbf16>
    %26 = arith.truncf %21 : vector<4x256xf32> to vector<4x256xbf16>
    %27 = arith.truncf %5 : vector<4x256xf32> to vector<4x256xbf16>
    %c0_11 = arith.constant 0 : index
    %c0_12 = arith.constant 0 : index
    %28 = vector.load %arg4[%c0_11, %c0_12] : memref<4x4xf32, #tpu.memory_space<vmem>>, vector<4x4xf32>
    %29 = arith.truncf %28 : vector<4x4xf32> to vector<4x4xbf16>
    %cst_13 = arith.constant 0.000000e+00 : f32
    %30 = vector.broadcast %cst_13 : f32 to vector<4x256xf32>
    %31 = vector.extract_strided_slice %25 {offsets = [0, 0], sizes = [2, 256], strides = [1, 1]} : vector<4x256xbf16> to vector<2x256xbf16>
    %32 = vector.extract_strided_slice %26 {offsets = [0, 0], sizes = [2, 256], strides = [1, 1]} : vector<4x256xbf16> to vector<2x256xbf16>
    %cst_14 = arith.constant dense<0.000000e+00> : vector<2x2xf32>
    %33 = tpu.matmul %31, %32, %cst_14 {dimension_numbers = #tpu.dot_dimension_numbers<[1], [1], [0], [0], [0, 0, 1, 0], [], []>} : vector<2x256xbf16>, vector<2x256xbf16>, vector<2x2xf32> -> vector<2x2xf32>
    %c0_15 = arith.constant 0 : index
    %34 = memref.load %arg1[%c0_15] : memref<2xf32, #tpu.memory_space<smem>>
    %35 = vector.broadcast %34 : f32 to vector<2x2xf32>
    %36 = arith.mulf %33, %35 : vector<2x2xf32>
    %cst_16 = arith.constant dense<0xFF800000> : vector<2xf32>
    %37 = vector.multi_reduction <maximumf>, %36, %cst_16 [1] : vector<2x2xf32> to vector<2xf32>
    %38 = vector.shape_cast %37 : vector<2xf32> to vector<2x1xf32>
    %39 = vector.broadcast %38 : vector<2x1xf32> to vector<2x2xf32>
    %40 = arith.subf %36, %39 : vector<2x2xf32>
    %41 = math.exp %40 : vector<2x2xf32>
    %cst_17 = arith.constant dense<0.000000e+00> : vector<2xf32>
    %42 = vector.multi_reduction <add>, %41, %cst_17 [1] : vector<2x2xf32> to vector<2xf32>
    %43 = vector.shape_cast %42 : vector<2xf32> to vector<2x1xf32>
    %44 = tpu.reciprocal %43 {approx = true} : vector<2x1xf32> -> vector<2x1xf32>
    %45 = vector.broadcast %44 : vector<2x1xf32> to vector<2x2xf32>
    %46 = arith.mulf %41, %45 : vector<2x2xf32>
    %c0_18 = arith.constant 0 : index
    %c0_19 = arith.constant 0 : index
    %c0_20 = arith.constant 0 : index
    %c0_21 = arith.constant 0 : index
    %47 = vector.load %arg7[%c0_18, %c0_19, %c0_20, %c0_21] : memref<1x2x2x2xf32, #tpu.memory_space<vmem>>, vector<1x1x2x2xf32>
    %48 = vector.shape_cast %47 : vector<1x1x2x2xf32> to vector<2x2xf32>
    %49 = vector.shape_cast %46 : vector<2x2xf32> to vector<1x1x2x2xf32>
    tpu.vector_store %arg7[%c0_18, %c0_19, %c0_20, %c0_21], %49 {strides = array<i32>} : memref<1x2x2x2xf32, #tpu.memory_space<vmem>>, vector<1x1x2x2xf32>,
    %50 = arith.truncf %46 : vector<2x2xf32> to vector<2x2xbf16>
    %51 = vector.extract_strided_slice %27 {offsets = [0, 0], sizes = [2, 256], strides = [1, 1]} : vector<4x256xbf16> to vector<2x256xbf16>
    %cst_22 = arith.constant dense<0.000000e+00> : vector<2x256xf32>
    %52 = tpu.matmul %50, %51, %cst_22 {dimension_numbers = #tpu.dot_dimension_numbers<[1], [0], [0], [1], [0, 0, 1, 1], [], []>} : vector<2x2xbf16>, vector<2x256xbf16>, vector<2x256xf32> -> vector<2x256xf32>
    %53 = vector.extract_strided_slice %29 {offsets = [0, 0], sizes = [4, 2], strides = [1, 1]} : vector<4x4xbf16> to vector<4x2xbf16>
    %54 = arith.truncf %52 : vector<2x256xf32> to vector<2x256xbf16>
    %cst_23 = arith.constant dense<0.000000e+00> : vector<4x256xf32>
    %55 = tpu.matmul %53, %54, %cst_23 {dimension_numbers = #tpu.dot_dimension_numbers<[1], [0], [0], [1], [0, 0, 1, 1], [], []>} : vector<4x2xbf16>, vector<2x256xbf16>, vector<4x256xf32> -> vector<4x256xf32>
    %56 = arith.addf %30, %55 : vector<4x256xf32>
    %57 = vector.extract_strided_slice %25 {offsets = [2, 0], sizes = [2, 256], strides = [1, 1]} : vector<4x256xbf16> to vector<2x256xbf16>
    %58 = vector.extract_strided_slice %26 {offsets = [2, 0], sizes = [2, 256], strides = [1, 1]} : vector<4x256xbf16> to vector<2x256xbf16>
    %cst_24 = arith.constant dense<0.000000e+00> : vector<2x2xf32>
    %59 = tpu.matmul %57, %58, %cst_24 {dimension_numbers = #tpu.dot_dimension_numbers<[1], [1], [0], [0], [0, 0, 1, 0], [], []>} : vector<2x256xbf16>, vector<2x256xbf16>, vector<2x2xf32> -> vector<2x2xf32>
    %c1 = arith.constant 1 : index
    %60 = memref.load %arg1[%c1] : memref<2xf32, #tpu.memory_space<smem>>
    %61 = vector.broadcast %60 : f32 to vector<2x2xf32>
    %62 = arith.mulf %59, %61 : vector<2x2xf32>
    %cst_25 = arith.constant dense<0xFF800000> : vector<2xf32>
    %63 = vector.multi_reduction <maximumf>, %62, %cst_25 [1] : vector<2x2xf32> to vector<2xf32>
    %64 = vector.shape_cast %63 : vector<2xf32> to vector<2x1xf32>
    %65 = vector.broadcast %64 : vector<2x1xf32> to vector<2x2xf32>
    %66 = arith.subf %62, %65 : vector<2x2xf32>
    %67 = math.exp %66 : vector<2x2xf32>
    %cst_26 = arith.constant dense<0.000000e+00> : vector<2xf32>
    %68 = vector.multi_reduction <add>, %67, %cst_26 [1] : vector<2x2xf32> to vector<2xf32>
    %69 = vector.shape_cast %68 : vector<2xf32> to vector<2x1xf32>
    %70 = tpu.reciprocal %69 {approx = true} : vector<2x1xf32> -> vector<2x1xf32>
    %71 = vector.broadcast %70 : vector<2x1xf32> to vector<2x2xf32>
    %72 = arith.mulf %67, %71 : vector<2x2xf32>
    %c0_27 = arith.constant 0 : index
    %c1_28 = arith.constant 1 : index
    %c0_29 = arith.constant 0 : index
    %c0_30 = arith.constant 0 : index
    %73 = vector.load %arg7[%c0_27, %c1_28, %c0_29, %c0_30] : memref<1x2x2x2xf32, #tpu.memory_space<vmem>>, vector<1x1x2x2xf32>
    %74 = vector.shape_cast %73 : vector<1x1x2x2xf32> to vector<2x2xf32>
    %75 = vector.shape_cast %72 : vector<2x2xf32> to vector<1x1x2x2xf32>
    tpu.vector_store %arg7[%c0_27, %c1_28, %c0_29, %c0_30], %75 {strides = array<i32>} : memref<1x2x2x2xf32, #tpu.memory_space<vmem>>, vector<1x1x2x2xf32>,
    %76 = arith.truncf %72 : vector<2x2xf32> to vector<2x2xbf16>
    %77 = vector.extract_strided_slice %27 {offsets = [2, 0], sizes = [2, 256], strides = [1, 1]} : vector<4x256xbf16> to vector<2x256xbf16>
    %cst_31 = arith.constant dense<0.000000e+00> : vector<2x256xf32>
    %78 = tpu.matmul %76, %77, %cst_31 {dimension_numbers = #tpu.dot_dimension_numbers<[1], [0], [0], [1], [0, 0, 1, 1], [], []>} : vector<2x2xbf16>, vector<2x256xbf16>, vector<2x256xf32> -> vector<2x256xf32>
    %79 = vector.extract_strided_slice %29 {offsets = [0, 2], sizes = [4, 2], strides = [1, 1]} : vector<4x4xbf16> to vector<4x2xbf16>
    %80 = arith.truncf %78 : vector<2x256xf32> to vector<2x256xbf16>
    %cst_32 = arith.constant dense<0.000000e+00> : vector<4x256xf32>
    %81 = tpu.matmul %79, %80, %cst_32 {dimension_numbers = #tpu.dot_dimension_numbers<[1], [0], [0], [1], [0, 0, 1, 1], [], []>} : vector<4x2xbf16>, vector<2x256xbf16>, vector<4x256xf32> -> vector<4x256xf32>
    %82 = arith.addf %56, %81 : vector<4x256xf32>
    %c0_33 = arith.constant 0 : index
    %c0_34 = arith.constant 0 : index
    %c0_35 = arith.constant 0 : index
    %83 = vector.load %arg5[%c0_33, %c0_34, %c0_35] : memref<1x4x256xf32, #tpu.memory_space<vmem>>, vector<1x4x256xf32>
    %84 = vector.shape_cast %83 : vector<1x4x256xf32> to vector<4x256xf32>
    %85 = vector.shape_cast %82 : vector<4x256xf32> to vector<1x4x256xf32>
    tpu.vector_store %arg5[%c0_33, %c0_34, %c0_35], %85 {strides = array<i32>} : memref<1x4x256xf32, #tpu.memory_space<vmem>>, vector<1x4x256xf32>,
    return
  }
  func.func @transform_0(%arg0: i32) -> i32 {
    %c0_i32 = arith.constant 0 : i32
    %c0_i32_0 = arith.constant 0 : i32
    return %c0_i32 : i32
  }
  func.func @transform_1(%arg0: i32) -> (i32, i32, i32) {
    %c0_i32 = arith.constant 0 : i32
    %c0_i32_0 = arith.constant 0 : i32
    %c0_i32_1 = arith.constant 0 : i32
    return %arg0, %c0_i32, %c0_i32_0 : i32, i32, i32
  }
  func.func @transform_2(%arg0: i32) -> (i32, i32, i32) {
    %c0_i32 = arith.constant 0 : i32
    %c0_i32_0 = arith.constant 0 : i32
    %c0_i32_1 = arith.constant 0 : i32
    return %arg0, %c0_i32, %c0_i32_0 : i32, i32, i32
  }
  func.func @transform_3(%arg0: i32) -> (i32, i32) {
    %c0_i32 = arith.constant 0 : i32
    %c0_i32_0 = arith.constant 0 : i32
    %c0_i32_1 = arith.constant 0 : i32
    return %c0_i32, %c0_i32_0 : i32, i32
  }
  func.func @transform_4(%arg0: i32) -> (i32, i32, i32) {
    %c0_i32 = arith.constant 0 : i32
    %c0_i32_0 = arith.constant 0 : i32
    %c0_i32_1 = arith.constant 0 : i32
    return %arg0, %c0_i32, %c0_i32_0 : i32, i32, i32
  }
  func.func @transform_5(%arg0: i32) -> (i32, i32, i32) {
    %c0_i32 = arith.constant 0 : i32
    %c0_i32_0 = arith.constant 0 : i32
    %c0_i32_1 = arith.constant 0 : i32
    return %arg0, %c0_i32, %c0_i32_0 : i32, i32, i32
  }
  func.func @transform_6(%arg0: i32) -> (i32, i32, i32, i32) {
    %c0_i32 = arith.constant 0 : i32
    %c0_i32_0 = arith.constant 0 : i32
    %c0_i32_1 = arith.constant 0 : i32
    %c0_i32_2 = arith.constant 0 : i32
    return %arg0, %c0_i32, %c0_i32_0, %c0_i32_1 : i32, i32, i32, i32
  }
}

</mosaic_0001>

<llo_original>
// kernel: mdta_forward.3
$region0: #{mdta_forward.3}
  #allocation0 [shape = 'u32[]', space=smem, size = 0x4, offset = 0x4, fixed_abs, tag = 'smem constant byte address 0x4 - core index']
  #allocation1 [shape = 'u32[144,128]{1,0:T(1,128)}', space=vmem, size = 0x12000, scoped, tag = 'internal scratch']
  %s0 = inlined_call_operand.vmem [shape: f32[2], index: 0, kind: input, shape index: {}]
  %s1 = inlined_call_operand.vmem [shape: f32[2,4,256], index: 1, kind: input, shape index: {}]
  %s2 = inlined_call_operand.vmem [shape: f32[2,8,256], index: 2, kind: input, shape index: {}]
  %s3 = inlined_call_operand.vmem [shape: f32[4,4], index: 3, kind: input, shape index: {}]
  %s4 = inlined_call_operand.vmem [shape: f32[2,4,256], index: 4, kind: output, shape index: {0}]
  %s5 = inlined_call_operand.vmem [shape: f32[2,4,256], index: 5, kind: output, shape index: {1}]
  %s6 = inlined_call_operand.hbm [shape: f32[2,2,2,2], index: 6, kind: output, shape index: {2}]
  %7 = xla_tuple %s4, %s5, %s6
  %s8 = sld [smem:[#allocation0]]
  $region69: #{mdta_forward.3} parent=0
    _
  %s10 = ssub.s32 1, %s8
  %s11 = scalar_select 0, %s10, %s8
  $region1: #{mdta_forward.3} parent=0
    #allocation2 [shape = 'u8[512]{0}', space=smem, size = 0x200, scoped, tag = 'input window, operand 0, single buffered']
    #allocation3 [shape = 's32[2]{0}', space=sflag, size = 0x8, scoped, tag = 'scoped memory for mdta_forward.3']
    #allocation4 [shape = 's32[2]{0}', space=sflag, size = 0x8, scoped, tag = 'scoped memory for mdta_forward.3']
    #allocation5 [shape = 'u8[4096]{0}', space=vmem, size = 0x1000, scoped, tag = 'output window, operand 2']
    %12 = vsyncpa [#allocation4], 0
    %13 = vsyncpa [#allocation3], 0
    %s14 = scalar_lea.sflag [#allocation3], 1
    %15 = vsyncpa %s14, 0
    loop: start=0, step=1, limit=4
    $region2: #{mdta_forward.3} parent=1 // loop_pre_header
      _
    $region3: #{mdta_forward.3} parent=1 // loop_header
      %s17 = sphi 0, %s21
      %p18 = scmp.ge.s32.totalorder %s17, 4
      %s25 = sphi 0, %s25
      %s27 = sphi 0, %s25
      %s28 = sphi 0, %s27
      %s42 = sphi 0, %s28
      %s48 = sphi 0, %s50
      %s51 = sphi 0, %s48
      %s52 = sphi 0, %s51
      %s68 = sphi 0, %s52
      %s74 = sphi 0, %s76
      %s77 = sphi 0, %s74
      %s78 = sphi 0, %s77
      %s94 = sphi 0, %s78
      %s98 = sphi 0, %s98
      %s100 = sphi 0, %s98
      %s101 = sphi 0, %s100
      %s115 = sphi 0, %s101
      %s121 = sphi 0, %s123
      %s124 = sphi 0, %s121
      %s125 = sphi 0, %s124
      %s141 = sphi 0, %s125
      %s147 = sphi 0, %s149
      %s150 = sphi 0, %s147
      %s151 = sphi 0, %s150
      %s167 = sphi 0, %s151
      %s173 = sphi 0, %s175
      %s176 = sphi 0, %s173
      %s177 = sphi 0, %s176
      %s193 = sphi 0, %s177
    $region4: #{mdta_forward.3} parent=1 // loop_header_branch
      %20 = sbr.rel (%p18) target = $region8
    $region5: #{mdta_forward.3} parent=1 // loop_body
      %s22 = ssub.s32 %s17, 1
      %s23 = ssub.s32 %s17, 2
      %s24 = sadd.s32 %s17, 1
      %s26 = sadd.s32 %s25, 1
      %p29 = scmp.eq.s32.totalorder %s17, 1
      %p30 = scmp.ne.s32.totalorder %s25, %s27
      %p31 = scmp.eq.s32.totalorder %s17, 0
      %p32 = por %p30, %p31
      %p33 = scmp.ne.s32.totalorder %s25, %s27
      %p34 = scmp.eq.s32.totalorder %s22, 1
      %p35 = por %p33, %p34
      %p36 = scmp.ne.s32.totalorder %s27, %s28
      %p37 = scmp.eq.s32.totalorder %s22, 0
      %p38 = por %p36, %p37
      %p39 = scmp.ne.s32.totalorder %s27, %s28
      %p40 = scmp.eq.s32.totalorder %s23, 1
      %p41 = por %p39, %p40
      %p43 = scmp.ne.s32.totalorder %s28, %s42
      %p44 = scmp.eq.s32.totalorder %s23, 0
      %p45 = por %p43, %p44
      %s46 = ssub.s32 %s17, %s24
      %p47 = scmp.eq.s32.totalorder %s46, 0
      %s49 = sadd.s32 %s48, 1
      %s50 = scalar_select %p47, %s48, %s49
      %p53 = pneg %p47
      %p54 = scmp.eq.s32.totalorder %s17, 1
      %p55 = por %p53, %p54
      %p56 = scmp.ne.s32.totalorder %s48, %s51
      %p57 = scmp.eq.s32.totalorder %s17, 0
      %p58 = por %p56, %p57
      %p59 = scmp.ne.s32.totalorder %s48, %s51
      %p60 = scmp.eq.s32.totalorder %s22, 1
      %p61 = por %p59, %p60
      %p62 = scmp.ne.s32.totalorder %s51, %s52
      %p63 = scmp.eq.s32.totalorder %s22, 0
      %p64 = por %p62, %p63
      %p65 = scmp.ne.s32.totalorder %s51, %s52
      %p66 = scmp.eq.s32.totalorder %s23, 1
      %p67 = por %p65, %p66
      %p69 = scmp.ne.s32.totalorder %s52, %s68
      %p70 = scmp.eq.s32.totalorder %s23, 0
      %p71 = por %p69, %p70
      %s72 = ssub.s32 %s17, %s24
      %p73 = scmp.eq.s32.totalorder %s72, 0
      %s75 = sadd.s32 %s74, 1
      %s76 = scalar_select %p73, %s74, %s75
      %p79 = pneg %p73
      %p80 = scmp.eq.s32.totalorder %s17, 1
      %p81 = por %p79, %p80
      %p82 = scmp.ne.s32.totalorder %s74, %s77
      %p83 = scmp.eq.s32.totalorder %s17, 0
      %p84 = por %p82, %p83
      %p85 = scmp.ne.s32.totalorder %s74, %s77
      %p86 = scmp.eq.s32.totalorder %s22, 1
      %p87 = por %p85, %p86
      %p88 = scmp.ne.s32.totalorder %s77, %s78
      %p89 = scmp.eq.s32.totalorder %s22, 0
      %p90 = por %p88, %p89
      %p91 = scmp.ne.s32.totalorder %s77, %s78
      %p92 = scmp.eq.s32.totalorder %s23, 1
      %p93 = por %p91, %p92
      %p95 = scmp.ne.s32.totalorder %s78, %s94
      %p96 = scmp.eq.s32.totalorder %s23, 0
      %p97 = por %p95, %p96
      %s99 = sadd.s32 %s98, 1
      %p102 = scmp.eq.s32.totalorder %s17, 1
      %p103 = scmp.ne.s32.totalorder %s98, %s100
      %p104 = scmp.eq.s32.totalorder %s17, 0
      %p105 = por %p103, %p104
      %p106 = scmp.ne.s32.totalorder %s98, %s100
      %p107 = scmp.eq.s32.totalorder %s22, 1
      %p108 = por %p106, %p107
      %p109 = scmp.ne.s32.totalorder %s100, %s101
      %p110 = scmp.eq.s32.totalorder %s22, 0
      %p111 = por %p109, %p110
      %p112 = scmp.ne.s32.totalorder %s100, %s101
      %p113 = scmp.eq.s32.totalorder %s23, 1
      %p114 = por %p112, %p113
      %p116 = scmp.ne.s32.totalorder %s101, %s115
      %p117 = scmp.eq.s32.totalorder %s23, 0
      %p118 = por %p116, %p117
      %s119 = ssub.s32 %s17, %s24
      %p120 = scmp.eq.s32.totalorder %s119, 0
      %s122 = sadd.s32 %s121, 1
      %s123 = scalar_select %p120, %s121, %s122
      %p126 = pneg %p120
      %p127 = scmp.eq.s32.totalorder %s17, 1
      %p128 = por %p126, %p127
      %p129 = scmp.ne.s32.totalorder %s121, %s124
      %p130 = scmp.eq.s32.totalorder %s17, 0
      %p131 = por %p129, %p130
      %p132 = scmp.ne.s32.totalorder %s121, %s124
      %p133 = scmp.eq.s32.totalorder %s22, 1
      %p134 = por %p132, %p133
      %p135 = scmp.ne.s32.totalorder %s124, %s125
      %p136 = scmp.eq.s32.totalorder %s22, 0
      %p137 = por %p135, %p136
      %p138 = scmp.ne.s32.totalorder %s124, %s125
      %p139 = scmp.eq.s32.totalorder %s23, 1
      %p140 = por %p138, %p139
      %p142 = scmp.ne.s32.totalorder %s125, %s141
      %p143 = scmp.eq.s32.totalorder %s23, 0
      %p144 = por %p142, %p143
      %s145 = ssub.s32 %s17, %s24
      %p146 = scmp.eq.s32.totalorder %s145, 0
      %s148 = sadd.s32 %s147, 1
      %s149 = scalar_select %p146, %s147, %s148
      %p152 = pneg %p146
      %p153 = scmp.eq.s32.totalorder %s17, 1
      %p154 = por %p152, %p153
      %p155 = scmp.ne.s32.totalorder %s147, %s150
      %p156 = scmp.eq.s32.totalorder %s17, 0
      %p157 = por %p155, %p156
      %p158 = scmp.ne.s32.totalorder %s147, %s150
      %p159 = scmp.eq.s32.totalorder %s22, 1
      %p160 = por %p158, %p159
      %p161 = scmp.ne.s32.totalorder %s150, %s151
      %p162 = scmp.eq.s32.totalorder %s22, 0
      %p163 = por %p161, %p162
      %p164 = scmp.ne.s32.totalorder %s150, %s151
      %p165 = scmp.eq.s32.totalorder %s23, 1
      %p166 = por %p164, %p165
      %p168 = scmp.ne.s32.totalorder %s151, %s167
      %p169 = scmp.eq.s32.totalorder %s23, 0
      %p170 = por %p168, %p169
      %s171 = ssub.s32 %s17, %s24
      %p172 = scmp.eq.s32.totalorder %s171, 0
      %s174 = sadd.s32 %s173, 1
      %s175 = scalar_select %p172, %s173, %s174
      %p178 = pneg %p172
      %p179 = scmp.eq.s32.totalorder %s17, 1
      %p180 = por %p178, %p179
      %p181 = scmp.ne.s32.totalorder %s173, %s176
      %p182 = scmp.eq.s32.totalorder %s17, 0
      %p183 = por %p181, %p182
      %p184 = scmp.ne.s32.totalorder %s173, %s176
      %p185 = scmp.eq.s32.totalorder %s22, 1
      %p186 = por %p184, %p185
      %p187 = scmp.ne.s32.totalorder %s176, %s177
      %p188 = scmp.eq.s32.totalorder %s22, 0
      %p189 = por %p187, %p188
      %p190 = scmp.ne.s32.totalorder %s176, %s177
      %p191 = scmp.eq.s32.totalorder %s23, 1
      %p192 = por %p190, %p191
      %p194 = scmp.ne.s32.totalorder %s177, %s193
      %p195 = scmp.eq.s32.totalorder %s23, 0
      %p196 = por %p194, %p195
      %p197 = scmp.le.s32.totalorder 1, %s17
      %p198 = scmp.lt.s32.totalorder %s17, 3
      %p199 = pnand %p197, %p198
      %p200 = pneg %p199
      // Predicated region
      $region9: #{mdta_forward.3} parent=5 // pred_check
        _
      $region10: #{mdta_forward.3} parent=5 // pred_check_branch
        %202 = sbr.rel (%p199) target = $region12
      $region11: #{mdta_forward.3} parent=5 // pred_region
        %s203 = ssub.s32 %s17, 1
        // Predicated region
        $region13: #{mdta_forward.3} parent=11 // pred_check
          %p204 = pneg %p38
        $region14: #{mdta_forward.3} parent=11 // pred_check_branch
          %206 = sbr.rel (%p204) target = $region16
        $region15: #{mdta_forward.3} parent=11 // pred_region
          %s208 = ssub.s32 16, 16
          %209 = vsyncadd [#allocation4], %s208
          %s211 = sshll.u32 %s0, 4
          %s212 = int_to_ptr.vmem [resolvable:$true] %s211
          %214 = dma.vmem_to_smem %s212, 16, [#allocation2], [#allocation4]
        $region16: #{mdta_forward.3} parent=11 // pred_fallthru
          _
        // Predicated region
        $region17: #{mdta_forward.3} parent=11 // pred_check
          %p215 = pneg %p111
        $region18: #{mdta_forward.3} parent=11 // pred_check_branch
          %217 = sbr.rel (%p215) target = $region20
        $region19: #{mdta_forward.3} parent=11 // pred_region
          _
        $region20: #{mdta_forward.3} parent=11 // pred_fallthru
          _
      $region12: #{mdta_forward.3} parent=5 // pred_fallthru
        _
      %p218 = scmp.lt.s32.totalorder %s17, 2
      // Predicated region
      $region21: #{mdta_forward.3} parent=5 // pred_check
        %p219 = pneg %p218
      $region22: #{mdta_forward.3} parent=5 // pred_check_branch
        %221 = sbr.rel (%p219) target = $region24
      $region23: #{mdta_forward.3} parent=5 // pred_region
        // Predicated region
        $region25: #{mdta_forward.3} parent=23 // pred_check
          %p222 = pneg %p58
        $region26: #{mdta_forward.3} parent=23 // pred_check_branch
          %224 = sbr.rel (%p222) target = $region28
        $region27: #{mdta_forward.3} parent=23 // pred_region
          %p225 = scmp.lt.s32.totalorder %s17, 1
          %s226 = scalar_select %p225, %s17, 1
          %s227 = smul.addr %s226, 2
          %s228 = smul.addr %s227, 4
          %s229 = scalar_lea.vmem %s1, %s228
        $region28: #{mdta_forward.3} parent=23 // pred_fallthru
          _
        // Predicated region
        $region29: #{mdta_forward.3} parent=23 // pred_check
          %p230 = pneg %p84
        $region30: #{mdta_forward.3} parent=23 // pred_check_branch
          %232 = sbr.rel (%p230) target = $region32
        $region31: #{mdta_forward.3} parent=23 // pred_region
          %p233 = scmp.lt.s32.totalorder %s17, 1
          %s234 = scalar_select %p233, %s17, 1
          %s235 = smul.addr %s234, 2
          %s236 = smul.addr %s235, 8
          %s237 = scalar_lea.vmem %s2, %s236
        $region32: #{mdta_forward.3} parent=23 // pred_fallthru
          _
      $region24: #{mdta_forward.3} parent=5 // pred_fallthru
        _
      %p238 = scmp.le.s32.totalorder 1, %s17
      %p239 = scmp.lt.s32.totalorder %s17, 3
      %p240 = pnand %p238, %p239
      %p241 = pneg %p240
      // Predicated region
      $region33: #{mdta_forward.3} parent=5 // pred_check
        _
      $region34: #{mdta_forward.3} parent=5 // pred_check_branch
        %243 = sbr.rel (%p240) target = $region36
      $region35: #{mdta_forward.3} parent=5 // pred_region
        %s244 = ssub.s32 %s17, 1
        // Predicated region
        $region37: #{mdta_forward.3} parent=35 // pred_check
          %p245 = pneg %p38
        $region38: #{mdta_forward.3} parent=35 // pred_check_branch
          %247 = sbr.rel (%p245) target = $region40
        $region39: #{mdta_forward.3} parent=35 // pred_region
          %248 = dma.done [#allocation4], 16
        $region40: #{mdta_forward.3} parent=35 // pred_fallthru
          _
        %249 = sfence
        %p250 = pneg %p38
        %p251 = pneg %p35
        %p252 = scmp.lt.s32.totalorder %s22, 1
        %s253 = scalar_select %p252, %s22, 1
        %s254 = smul.addr %s253, 2
        %s255 = smul.addr %s254, 4
        %s256 = scalar_lea.vmem %s1, %s255
        %p257 = pneg %p64
        %p258 = pneg %p61
        %p259 = scmp.lt.s32.totalorder %s22, 1
        %s260 = scalar_select %p259, %s22, 1
        %s261 = smul.addr %s260, 2
        %s262 = smul.addr %s261, 8
        %s263 = scalar_lea.vmem %s2, %s262
        %p264 = pneg %p90
        %p265 = pneg %p87
        %p266 = pneg %p111
        %p267 = pneg %p108
        %p268 = pneg %p137
        %p269 = pneg %p134
        %p270 = scmp.lt.s32.totalorder %s22, 1
        %s271 = scalar_select %p270, %s22, 1
        %s272 = smul.addr %s271, 2
        %s273 = smul.addr %s272, 4
        %s274 = scalar_lea.vmem %s4, %s273
        %p275 = pneg %p163
        %p276 = pneg %p160
        %p277 = scmp.lt.s32.totalorder %s22, 1
        %s278 = scalar_select %p277, %s22, 1
        %s279 = smul.addr %s278, 2
        %s280 = smul.addr %s279, 4
        %s281 = scalar_lea.vmem %s5, %s280
        %p282 = pneg %p189
        %p283 = pneg %p186
        %s284 = sand.u32 %s176, 1
        %s285 = scalar_lea.sflag [#allocation3], %s284
        %s286 = sand.u32 %s176, 1
        %s287 = smul.addr %s286, 4
        %s288 = scalar_lea.vmem [#allocation5], %s287
        %p289 = scmp.lt.s32.totalorder %s22, 1
        %s290 = scalar_select %p289, %s22, 1
        %s291 = smul.addr %s290, 2
        %s292 = smul.addr %s291, 4
        %s293 = scalar_lea.vmem %s1, %s292
        %p294 = scmp.lt.s32.totalorder %s22, 1
        %s295 = scalar_select %p294, %s22, 1
        %s296 = smul.addr %s295, 2
        %s297 = smul.addr %s296, 8
        %s298 = scalar_lea.vmem %s2, %s297
        %p299 = scmp.lt.s32.totalorder %s22, 1
        %s300 = scalar_select %p299, %s22, 1
        %s301 = smul.addr %s300, 2
        %s302 = smul.addr %s301, 4
        %s303 = scalar_lea.vmem %s4, %s302
        %p304 = scmp.lt.s32.totalorder %s22, 1
        %s305 = scalar_select %p304, %s22, 1
        %s306 = smul.addr %s305, 2
        %s307 = smul.addr %s306, 4
        %s308 = scalar_lea.vmem %s5, %s307
        %v310 = vld [vmem:[%s293] sm:$0xff]
        %v311 = vld [vmem:[%s298] sm:$0xff]
        %v312 = vld [vmem:[%s298 + $0x8] sm:$0xff]
        %v313 = vmul.f32 %v310, %v310
        %v315 = vcombine.high %v313, %v313
        %vm317 = vcmask 1043456
        %v318 = vsel %vm317, %v313, 0.0
        %v319 = vsel %vm317, %v315, 0.0
        %v320 = vadd.f32 %v318, %v319
        %321 = vadd.xlane.f32.xlu0 %v320
        %v322 = vpop.xlane.xlu0 %321
        %v323 = vrsqrt.pop %v322
        %v324 = vmul.f32 %v322, %v323
        %vm325 = vcmp.eq.f32.partialorder %v322, inf
        %v326 = vsel %vm325, %v322, %v324
        %vm327 = vcmp.eq.f32.partialorder %v322, 0.0
        %v328 = vand.u32 %v322, 2147483648
        %v329 = vsel %vm327, %v328, %v326
        %v330 = vmax.f32 %v329, 1e-12
        %v333 = vunpack.c.l.s4 839922192
        %v334 = vunpack.c.0.s8 %v333
        %v335 = vlaneseq
        %v336 = vshrl.u32 %v335, 7
        %v337 = vsub.s32 %v334, %v336
        %v338 = vrot.slane %v330, %v337
        %v340 = vrcp.pop %v338
        %v341 = vmul.f32 %v310, %v340
        %v342 = vmul.f32 %v311, %v311
        %v343 = vmul.f32 %v312, %v312
        %v344 = vsel %vm317, %v342, 0.0
        %v345 = vsel %vm317, %v343, 0.0
        %v346 = vadd.f32 %v344, %v345
        %347 = vadd.xlane.f32.xlu0 %v346
        %v348 = vpop.xlane.xlu0 %347
        %v349 = vrsqrt.pop %v348
        %v350 = vmul.f32 %v348, %v349
        %vm351 = vcmp.eq.f32.partialorder %v348, inf
        %v352 = vsel %vm351, %v348, %v350
        %vm353 = vcmp.eq.f32.partialorder %v348, 0.0
        %v354 = vand.u32 %v348, 2147483648
        %v355 = vsel %vm353, %v354, %v352
        %v356 = vmax.f32 %v355, 1e-12
        %v357 = vrcp.pop %v356
        %v358 = vmul.f32 %v311, %v357
        %v359 = vmul.f32 %v312, %v357
        %360 = vst [vmem:[%s308] sm:$0xff] %v341
        %v362 = vcombine.high %v341, %v341
        %v364 = vpack.c.bf16 %v341, %v341
        %v365 = vpack.c.bf16 %v362, %v362
        %v366 = vpack.c.bf16 %v358, %v358
        %v367 = vpack.c.bf16 %v359, %v359
        %v368 = vpack.c.bf16 %v311, %v311
        %v369 = vpack.c.bf16 %v312, %v312
        %v370 = vld [vmem:[%s3] sm:$0xf]
        %v371 = vpack.c.bf16 %v370, %v370
        %372 = vmatprep.subr.bf16.mxu0 %v367
        %373 = vmatpush1.bf16.xpose.msra.mxu0 %v366
        %374 = vmatprep.subr.bf16.mxu0 0
        %375 = vmatpush1.bf16.xpose.msra.mxu0 0
        %376 = vmatprep.subr.bf16.mxu0 0
        %377 = vmatpush1.bf16.xpose.msra.mxu0 0
        %378 = vmatprep.subr.bf16.mxu0 0
        %379 = vmatpush1.bf16.xpose.msra.mxu0 0
        %380 = vmatprep.subr.bf16.mxu0 0
        %381 = vmatpush1.bf16.xpose.msra.mxu0 0
        %382 = vmatprep.subr.bf16.mxu0 0
        %383 = vmatpush1.bf16.xpose.msra.mxu0 0
        %384 = vmatprep.subr.bf16.mxu0 0
        %385 = vmatpush1.bf16.xpose.msra.mxu0 0
        %386 = vmatprep.subr.bf16.mxu0 0
        %387 = vmatpush1.bf16.xpose.msra.mxu0 0
        %388 = vmatprep.subr.bf16.mxu0 0
        %389 = vmatpush1.bf16.xpose.msra.mxu0 0
        %390 = vmatprep.subr.bf16.mxu0 0
        %391 = vmatpush1.bf16.xpose.msra.mxu0 0
        %392 = vmatprep.subr.bf16.mxu0 0
        %393 = vmatpush1.bf16.xpose.msra.mxu0 0
        %394 = vmatprep.subr.bf16.mxu0 0
        %395 = vmatpush1.bf16.xpose.msra.mxu0 0
        %396 = vmatprep.subr.bf16.mxu0 0
        %397 = vmatpush1.bf16.xpose.msra.mxu0 0
        %398 = vmatprep.subr.bf16.mxu0 0
        %399 = vmatpush1.bf16.xpose.msra.mxu0 0
        %400 = vmatprep.subr.bf16.mxu0 0
        %401 = vmatpush1.bf16.xpose.msra.mxu0 0
        %402 = vmatprep.subr.bf16.mxu0 0
        %403 = vmatpush1.bf16.xpose.msra.mxu0 0
        %404 = vmatprep.mubr.bf16.mxu0 %v365
        %405 = vmatmul.mubr.bf16.gmra.mrb[0].mxu0 %v364
        %v406 = vpop.f32.mrb[0].mxu0
        %v407 = vadd.f32 0.0, %v406
        %v408 = vpop.f32.mrb[0].mxu0
        %v409 = vpop.f32.mrb[0].mxu0
        %v410 = vpop.f32.mrb[0].mxu0
        %411 = vdwg.mxu0
        %s412 = sld [smem:[#allocation2]]
        %v413 = vstv %s412
        %v414 = vmul.f32 %v407, %v413
        %vm415 = vcmask 9216
        %v416 = vsel %vm415, %v414, -inf
        %417 = vmax.xlane.f32.xlu0 %v416
        %v418 = vpop.xlane.xlu0 %417
        %v419 = vsub.f32 %v414, %v418
        %v420 = vmul.f32 %v419, 1.442695
        %v421 = vpow.pop %v420
        %v422 = vsel %vm415, %v421, 0.0
        %423 = vadd.xlane.f32.xlu0 %v422
        %v424 = vpop.xlane.xlu0 %423
        %v425 = vrcp.pop %v424
        %v426 = vmul.f32 %v421, %v425
        %427 = vst.msk [vmem:[%s288] sm:$0x3] %vm415, %v426
        %v428 = vpack.c.bf16 %v426, %v426
        %v431 = vrot.slane %v368, 2
        %v432 = vrot.slane %v369, 2
        %vm433 = vcmask 15360
        %v435 = vsel %vm433, %v428, 0
        %vm437 = vcmask 1040384
        %v439 = vsel %vm437, %v431, 0
        %v442 = vsel %vm437, %v432, 0
        %444 = vmatprep.subr.bf16.mxu0 %v442
        %445 = vmatpush1.bf16.msra.mxu0 %v439
        %446 = vmatprep.subr.bf16.mxu0 0
        %447 = vmatpush1.bf16.msra.mxu0 0
        %448 = vmatprep.subr.bf16.mxu0 0
        %449 = vmatpush1.bf16.msra.mxu0 0
        %450 = vmatprep.subr.bf16.mxu0 0
        %451 = vmatpush1.bf16.msra.mxu0 0
        %452 = vmatprep.subr.bf16.mxu0 0
        %453 = vmatpush1.bf16.msra.mxu0 0
        %454 = vmatprep.subr.bf16.mxu0 0
        %455 = vmatpush1.bf16.msra.mxu0 0
        %456 = vmatprep.subr.bf16.mxu0 0
        %457 = vmatpush1.bf16.msra.mxu0 0
        %458 = vmatprep.subr.bf16.mxu0 0
        %459 = vmatpush1.bf16.msra.mxu0 0
        %460 = vmatprep.subr.bf16.mxu0 0
        %461 = vmatpush1.bf16.msra.mxu0 0
        %462 = vmatprep.subr.bf16.mxu0 0
        %463 = vmatpush1.bf16.msra.mxu0 0
        %464 = vmatprep.subr.bf16.mxu0 0
        %465 = vmatpush1.bf16.msra.mxu0 0
        %466 = vmatprep.subr.bf16.mxu0 0
        %467 = vmatpush1.bf16.msra.mxu0 0
        %468 = vmatprep.subr.bf16.mxu0 0
        %469 = vmatpush1.bf16.msra.mxu0 0
        %470 = vmatprep.subr.bf16.mxu0 0
        %471 = vmatpush1.bf16.msra.mxu0 0
        %472 = vmatprep.subr.bf16.mxu0 0
        %473 = vmatpush1.bf16.msra.mxu0 0
        %474 = vmatprep.subr.bf16.mxu0 0
        %475 = vmatpush1.bf16.msra.mxu0 0
        %476 = vmatprep.mubr.bf16.mxu0 0
        %477 = vmatmul.mubr.bf16.gmra.mrb[0].mxu0 %v435
        %v478 = vpop.f32.mrb[0].mxu0
        %v479 = vadd.f32 0.0, %v478
        %v480 = vpop.f32.mrb[0].mxu0
        %v481 = vadd.f32 0.0, %v480
        %v482 = vpop.f32.mrb[0].mxu0
        %v483 = vpop.f32.mrb[0].mxu0
        %484 = vdwg.mxu0
        %v485 = vpack.c.bf16 %v479, %v479
        %v486 = vpack.c.bf16 %v481, %v481
        %v489 = vrot.slane %v364, 1
        %v490 = vrot.slane %v365, 1
        %v495 = vrot.slane %v366, 1
        %v496 = vrot.slane %v367, 1
        %499 = vmatprep.subr.bf16.mxu0 %v496
        %500 = vmatpush1.bf16.xpose.msra.mxu0 %v495
        %501 = vmatprep.subr.bf16.mxu0 0
        %502 = vmatpush1.bf16.xpose.msra.mxu0 0
        %503 = vmatprep.subr.bf16.mxu0 0
        %504 = vmatpush1.bf16.xpose.msra.mxu0 0
        %505 = vmatprep.subr.bf16.mxu0 0
        %506 = vmatpush1.bf16.xpose.msra.mxu0 0
        %507 = vmatprep.subr.bf16.mxu0 0
        %508 = vmatpush1.bf16.xpose.msra.mxu0 0
        %509 = vmatprep.subr.bf16.mxu0 0
        %510 = vmatpush1.bf16.xpose.msra.mxu0 0
        %511 = vmatprep.subr.bf16.mxu0 0
        %512 = vmatpush1.bf16.xpose.msra.mxu0 0
        %513 = vmatprep.subr.bf16.mxu0 0
        %514 = vmatpush1.bf16.xpose.msra.mxu0 0
        %515 = vmatprep.subr.bf16.mxu0 0
        %516 = vmatpush1.bf16.xpose.msra.mxu0 0
        %517 = vmatprep.subr.bf16.mxu0 0
        %518 = vmatpush1.bf16.xpose.msra.mxu0 0
        %519 = vmatprep.subr.bf16.mxu0 0
        %520 = vmatpush1.bf16.xpose.msra.mxu0 0
        %521 = vmatprep.subr.bf16.mxu0 0
        %522 = vmatpush1.bf16.xpose.msra.mxu0 0
        %523 = vmatprep.subr.bf16.mxu0 0
        %524 = vmatpush1.bf16.xpose.msra.mxu0 0
        %525 = vmatprep.subr.bf16.mxu0 0
        %526 = vmatpush1.bf16.xpose.msra.mxu0 0
        %527 = vmatprep.subr.bf16.mxu0 0
        %528 = vmatpush1.bf16.xpose.msra.mxu0 0
        %529 = vmatprep.subr.bf16.mxu0 0
        %530 = vmatpush1.bf16.xpose.msra.mxu0 0
        %531 = vmatprep.mubr.bf16.mxu0 %v490
        %532 = vmatmul.mubr.bf16.gmra.mrb[0].mxu0 %v489
        %v533 = vpop.f32.mrb[0].mxu0
        %v534 = vadd.f32 0.0, %v533
        %v535 = vpop.f32.mrb[0].mxu0
        %v536 = vpop.f32.mrb[0].mxu0
        %v537 = vpop.f32.mrb[0].mxu0
        %538 = vdwg.mxu0
        %s539 = sld [smem:[#allocation2 + $0x1]]
        %v540 = vstv %s539
        %v541 = vmul.f32 %v534, %v540
        %v542 = vsel %vm415, %v541, -inf
        %543 = vmax.xlane.f32.xlu0 %v542
        %v544 = vpop.xlane.xlu0 %543
        %v545 = vsub.f32 %v541, %v544
        %v546 = vmul.f32 %v545, 1.442695
        %v547 = vpow.pop %v546
        %v548 = vsel %vm415, %v547, 0.0
        %549 = vadd.xlane.f32.xlu0 %v548
        %v550 = vpop.xlane.xlu0 %549
        %v551 = vrcp.pop %v550
        %v552 = vmul.f32 %v547, %v551
        %s553 = scalar_lea.vmem %s288, 2 [#allocation5]
        %554 = vst.msk [vmem:[%s553] sm:$0x3] %vm415, %v552
        %v555 = vpack.c.bf16 %v552, %v552
        %v556 = vrot.slane %v368, 3
        %v557 = vrot.slane %v369, 3
        %v559 = vsel %vm433, %v555, 0
        %v562 = vsel %vm437, %v556, 0
        %v565 = vsel %vm437, %v557, 0
        %567 = vmatprep.subr.bf16.mxu0 %v565
        %568 = vmatpush1.bf16.msra.mxu0 %v562
        %569 = vmatprep.subr.bf16.mxu0 0
        %570 = vmatpush1.bf16.msra.mxu0 0
        %571 = vmatprep.subr.bf16.mxu0 0
        %572 = vmatpush1.bf16.msra.mxu0 0
        %573 = vmatprep.subr.bf16.mxu0 0
        %574 = vmatpush1.bf16.msra.mxu0 0
        %575 = vmatprep.subr.bf16.mxu0 0
        %576 = vmatpush1.bf16.msra.mxu0 0
        %577 = vmatprep.subr.bf16.mxu0 0
        %578 = vmatpush1.bf16.msra.mxu0 0
        %579 = vmatprep.subr.bf16.mxu0 0
        %580 = vmatpush1.bf16.msra.mxu0 0
        %581 = vmatprep.subr.bf16.mxu0 0
        %582 = vmatpush1.bf16.msra.mxu0 0
        %583 = vmatprep.subr.bf16.mxu0 0
        %584 = vmatpush1.bf16.msra.mxu0 0
        %585 = vmatprep.subr.bf16.mxu0 0
        %586 = vmatpush1.bf16.msra.mxu0 0
        %587 = vmatprep.subr.bf16.mxu0 0
        %588 = vmatpush1.bf16.msra.mxu0 0
        %589 = vmatprep.subr.bf16.mxu0 0
        %590 = vmatpush1.bf16.msra.mxu0 0
        %591 = vmatprep.subr.bf16.mxu0 0
        %592 = vmatpush1.bf16.msra.mxu0 0
        %593 = vmatprep.subr.bf16.mxu0 0
        %594 = vmatpush1.bf16.msra.mxu0 0
        %595 = vmatprep.subr.bf16.mxu0 0
        %596 = vmatpush1.bf16.msra.mxu0 0
        %597 = vmatprep.subr.bf16.mxu0 0
        %598 = vmatpush1.bf16.msra.mxu0 0
        %599 = vmatprep.mubr.bf16.mxu0 0
        %600 = vmatmul.mubr.bf16.gmra.mrb[0].mxu0 %v559
        %v601 = vpop.f32.mrb[0].mxu0
        %v602 = vadd.f32 0.0, %v601
        %v603 = vpop.f32.mrb[0].mxu0
        %v604 = vadd.f32 0.0, %v603
        %v605 = vpop.f32.mrb[0].mxu0
        %v606 = vpop.f32.mrb[0].mxu0
        %607 = vdwg.mxu0
        %v608 = vpack.c.bf16 %v602, %v602
        %v609 = vpack.c.bf16 %v604, %v604
        %611 = vrot.lane.b32.xlu0 %v371, 126
        %v612 = vpop.permute.xlu0 %611
        %v614 = vsel %vm433, %v612, 0
        %v617 = vsel %vm437, %v608, 0
        %v620 = vsel %vm437, %v609, 0
        %622 = vmatprep.subr.bf16.mxu0 %v620
        %623 = vmatpush1.bf16.msra.mxu0 %v617
        %624 = vmatprep.subr.bf16.mxu0 0
        %625 = vmatpush1.bf16.msra.mxu0 0
        %626 = vmatprep.subr.bf16.mxu0 0
        %627 = vmatpush1.bf16.msra.mxu0 0
        %628 = vmatprep.subr.bf16.mxu0 0
        %629 = vmatpush1.bf16.msra.mxu0 0
        %630 = vmatprep.subr.bf16.mxu0 0
        %631 = vmatpush1.bf16.msra.mxu0 0
        %632 = vmatprep.subr.bf16.mxu0 0
        %633 = vmatpush1.bf16.msra.mxu0 0
        %634 = vmatprep.subr.bf16.mxu0 0
        %635 = vmatpush1.bf16.msra.mxu0 0
        %636 = vmatprep.subr.bf16.mxu0 0
        %637 = vmatpush1.bf16.msra.mxu0 0
        %638 = vmatprep.subr.bf16.mxu0 0
        %639 = vmatpush1.bf16.msra.mxu0 0
        %640 = vmatprep.subr.bf16.mxu0 0
        %641 = vmatpush1.bf16.msra.mxu0 0
        %642 = vmatprep.subr.bf16.mxu0 0
        %643 = vmatpush1.bf16.msra.mxu0 0
        %644 = vmatprep.subr.bf16.mxu0 0
        %645 = vmatpush1.bf16.msra.mxu0 0
        %646 = vmatprep.subr.bf16.mxu0 0
        %647 = vmatpush1.bf16.msra.mxu0 0
        %648 = vmatprep.subr.bf16.mxu0 0
        %649 = vmatpush1.bf16.msra.mxu0 0
        %650 = vmatprep.subr.bf16.mxu0 0
        %651 = vmatpush1.bf16.msra.mxu0 0
        %652 = vmatprep.subr.bf16.mxu0 0
        %653 = vmatpush1.bf16.msra.mxu0 0
        %654 = vmatprep.mubr.bf16.mxu0 0
        %655 = vmatmul.mubr.bf16.gmra.mrb[0].mxu0 %v614
        %v656 = vpop.f32.mrb[0].mxu0
        %v657 = vadd.f32 0.0, %v656
        %v658 = vpop.f32.mrb[0].mxu0
        %v659 = vadd.f32 0.0, %v658
        %v660 = vpop.f32.mrb[0].mxu0
        %v661 = vpop.f32.mrb[0].mxu0
        %662 = vdwg.mxu0
        %v664 = vsel %vm433, %v371, 0
        %v667 = vsel %vm437, %v485, 0
        %v670 = vsel %vm437, %v486, 0
        %672 = vmatprep.subr.bf16.mxu0 %v670
        %673 = vmatpush1.bf16.msra.mxu0 %v667
        %674 = vmatprep.subr.bf16.mxu0 0
        %675 = vmatpush1.bf16.msra.mxu0 0
        %676 = vmatprep.subr.bf16.mxu0 0
        %677 = vmatpush1.bf16.msra.mxu0 0
        %678 = vmatprep.subr.bf16.mxu0 0
        %679 = vmatpush1.bf16.msra.mxu0 0
        %680 = vmatprep.subr.bf16.mxu0 0
        %681 = vmatpush1.bf16.msra.mxu0 0
        %682 = vmatprep.subr.bf16.mxu0 0
        %683 = vmatpush1.bf16.msra.mxu0 0
        %684 = vmatprep.subr.bf16.mxu0 0
        %685 = vmatpush1.bf16.msra.mxu0 0
        %686 = vmatprep.subr.bf16.mxu0 0
        %687 = vmatpush1.bf16.msra.mxu0 0
        %688 = vmatprep.subr.bf16.mxu0 0
        %689 = vmatpush1.bf16.msra.mxu0 0
        %690 = vmatprep.subr.bf16.mxu0 0
        %691 = vmatpush1.bf16.msra.mxu0 0
        %692 = vmatprep.subr.bf16.mxu0 0
        %693 = vmatpush1.bf16.msra.mxu0 0
        %694 = vmatprep.subr.bf16.mxu0 0
        %695 = vmatpush1.bf16.msra.mxu0 0
        %696 = vmatprep.subr.bf16.mxu0 0
        %697 = vmatpush1.bf16.msra.mxu0 0
        %698 = vmatprep.subr.bf16.mxu0 0
        %699 = vmatpush1.bf16.msra.mxu0 0
        %700 = vmatprep.subr.bf16.mxu0 0
        %701 = vmatpush1.bf16.msra.mxu0 0
        %702 = vmatprep.subr.bf16.mxu0 0
        %703 = vmatpush1.bf16.msra.mxu0 0
        %704 = vmatprep.mubr.bf16.mxu0 0
        %705 = vmatmul.mubr.bf16.gmra.mrb[0].mxu0 %v664
        %v706 = vpop.f32.mrb[0].mxu0
        %v707 = vadd.f32 %v657, %v706
        %v708 = vpop.f32.mrb[0].mxu0
        %v709 = vadd.f32 %v659, %v708
        %v710 = vpop.f32.mrb[0].mxu0
        %v711 = vpop.f32.mrb[0].mxu0
        %712 = vdwg.mxu0
        %v715 = vcombine.low %v707, %v709
        %717 = vst [vmem:[%s303] sm:$0xff] %v715
        %p718 = scmp.lt.s32.totalorder %s22, 1
        %s719 = scalar_select %p718, %s22, 1
        %s720 = smul.addr %s719, 2
        %s721 = smul.addr %s720, 4
        %s722 = scalar_lea.vmem %s4, %s721
        %p723 = scmp.lt.s32.totalorder %s22, 1
        %s724 = scalar_select %p723, %s22, 1
        %s725 = smul.addr %s724, 2
        %s726 = smul.addr %s725, 4
        %s727 = scalar_lea.vmem %s5, %s726
        %s728 = sand.u32 %s176, 1
        %s729 = scalar_lea.sflag [#allocation3], %s728
        %s730 = sand.u32 %s176, 1
        %s731 = smul.addr %s730, 4
        %s732 = scalar_lea.vmem [#allocation5], %s731
        // Predicated region
        $region41: #{mdta_forward.3} parent=35 // pred_check
          %p733 = pneg %p134
        $region42: #{mdta_forward.3} parent=35 // pred_check_branch
          %735 = sbr.rel (%p733) target = $region44
        $region43: #{mdta_forward.3} parent=35 // pred_region
          _
        $region44: #{mdta_forward.3} parent=35 // pred_fallthru
          _
        // Predicated region
        $region45: #{mdta_forward.3} parent=35 // pred_check
          %p736 = pneg %p160
        $region46: #{mdta_forward.3} parent=35 // pred_check_branch
          %738 = sbr.rel (%p736) target = $region48
        $region47: #{mdta_forward.3} parent=35 // pred_region
          _
        $region48: #{mdta_forward.3} parent=35 // pred_fallthru
          _
        // Predicated region
        $region49: #{mdta_forward.3} parent=35 // pred_check
          %p739 = pneg %p186
        $region50: #{mdta_forward.3} parent=35 // pred_check_branch
          %741 = sbr.rel (%p739) target = $region52
        $region51: #{mdta_forward.3} parent=35 // pred_region
          %s743 = ssub.s32 64, 64
          %744 = vsyncadd %s729, %s743
          %s745 = smul.addr %s22, 2
          %s746 = smul.addr %s745, 32
          %s747 = scalar_lea.hbm %s6, %s746
          %s748 = sshll.u32 %s732, 4
          %s749 = int_to_ptr.vmem [resolvable:$true] %s748
          %754 = dma.vmem_to_hbm [thread:$0]  %s749, 64, %s747, %s729, 32, 32, 2
        $region52: #{mdta_forward.3} parent=35 // pred_fallthru
          _
      $region36: #{mdta_forward.3} parent=5 // pred_fallthru
        _
      %p755 = scmp.le.s32.totalorder 2, %s17
      // Predicated region
      $region53: #{mdta_forward.3} parent=5 // pred_check
        %p756 = pneg %p755
      $region54: #{mdta_forward.3} parent=5 // pred_check_branch
        %758 = sbr.rel (%p756) target = $region56
      $region55: #{mdta_forward.3} parent=5 // pred_region
        %s759 = ssub.s32 %s17, 2
        // Predicated region
        $region57: #{mdta_forward.3} parent=55 // pred_check
          %p760 = pneg %p140
        $region58: #{mdta_forward.3} parent=55 // pred_check_branch
          %762 = sbr.rel (%p760) target = $region60
        $region59: #{mdta_forward.3} parent=55 // pred_region
          %p763 = scmp.lt.s32.totalorder %s23, 1
          %s764 = scalar_select %p763, %s23, 1
          %s765 = smul.addr %s764, 2
          %s766 = smul.addr %s765, 4
          %s767 = scalar_lea.vmem %s4, %s766
        $region60: #{mdta_forward.3} parent=55 // pred_fallthru
          _
        // Predicated region
        $region61: #{mdta_forward.3} parent=55 // pred_check
          %p768 = pneg %p166
        $region62: #{mdta_forward.3} parent=55 // pred_check_branch
          %770 = sbr.rel (%p768) target = $region64
        $region63: #{mdta_forward.3} parent=55 // pred_region
          %p771 = scmp.lt.s32.totalorder %s23, 1
          %s772 = scalar_select %p771, %s23, 1
          %s773 = smul.addr %s772, 2
          %s774 = smul.addr %s773, 4
          %s775 = scalar_lea.vmem %s5, %s774
        $region64: #{mdta_forward.3} parent=55 // pred_fallthru
          _
        // Predicated region
        $region65: #{mdta_forward.3} parent=55 // pred_check
          %p776 = pneg %p192
        $region66: #{mdta_forward.3} parent=55 // pred_check_branch
          %778 = sbr.rel (%p776) target = $region68
        $region67: #{mdta_forward.3} parent=55 // pred_region
          %s779 = sand.u32 %s177, 1
          %s780 = scalar_lea.sflag [#allocation3], %s779
          %s781 = sand.u32 %s177, 1
          %s782 = smul.addr %s781, 4
          %s783 = scalar_lea.vmem [#allocation5], %s782
          %784 = dma.done %s780, 64
        $region68: #{mdta_forward.3} parent=55 // pred_fallthru
          _
      $region56: #{mdta_forward.3} parent=5 // pred_fallthru
        _
    $region6: #{mdta_forward.3} parent=1 // loop_footer
      %s21 = sadd.s32 1, %s17
    $region7: #{mdta_forward.3} parent=1 // loop_footer_branch
      %16 = sbr.rel target = $region3
    $region8: #{mdta_forward.3} parent=1 // loop_exit
      _
    %785 = vsyncpa [#allocation3], 1
    %s786 = scalar_lea.sflag [#allocation3], 1
    %787 = vsyncpa %s786, 1
    %788 = vsyncpa [#allocation4], 1
    %s789 = scalar_lea.sflag [#allocation4], 1
    %790 = vsyncpa %s789, 1

// kernel: mdta_forward.2
$region0: #{mdta_forward.2}
  #allocation0 [shape = 'u32[]', space=smem, size = 0x4, offset = 0x4, fixed_abs, tag = 'smem constant byte address 0x4 - core index']
  #allocation1 [shape = 'u32[144,128]{1,0:T(1,128)}', space=vmem, size = 0x12000, scoped, tag = 'internal scratch']
  %s0 = inlined_call_operand.vmem [shape: f32[2,4,290], index: 0, kind: input, shape index: {}]
  %s1 = inlined_call_operand.vmem [shape: f32[9,8,4], index: 1, kind: input, shape index: {}]
  %s2 = inlined_call_operand.vmem [shape: f32[2,8,256], index: 2, kind: output, shape index: {}]
  %s3 = sld [smem:[#allocation0]]
  $region41: #{mdta_forward.2} parent=0
    _
  %s5 = ssub.s32 1, %s3
  %s6 = scalar_select 0, %s5, %s3
  loop: start=0, step=1, limit=4
  $region2: #{mdta_forward.2} parent=0 // loop_pre_header
    _
  $region3: #{mdta_forward.2} parent=0 // loop_header
    %s8 = sphi 0, %s12
    %p9 = scmp.ge.s32.totalorder %s8, 4
    %s18 = sphi 0, %s20
    %s21 = sphi 0, %s18
    %s22 = sphi 0, %s21
    %s38 = sphi 0, %s22
    %s42 = sphi 0, %s42
    %s44 = sphi 0, %s42
    %s45 = sphi 0, %s44
    %s59 = sphi 0, %s45
    %s65 = sphi 0, %s67
    %s68 = sphi 0, %s65
    %s69 = sphi 0, %s68
    %s85 = sphi 0, %s69
  $region4: #{mdta_forward.2} parent=0 // loop_header_branch
    %11 = sbr.rel (%p9) target = $region8
  $region5: #{mdta_forward.2} parent=0 // loop_body
    %s13 = ssub.s32 %s8, 1
    %s14 = ssub.s32 %s8, 2
    %s15 = sadd.s32 %s8, 1
    %s16 = ssub.s32 %s8, %s15
    %p17 = scmp.eq.s32.totalorder %s16, 0
    %s19 = sadd.s32 %s18, 1
    %s20 = scalar_select %p17, %s18, %s19
    %p23 = pneg %p17
    %p24 = scmp.eq.s32.totalorder %s8, 1
    %p25 = por %p23, %p24
    %p26 = scmp.ne.s32.totalorder %s18, %s21
    %p27 = scmp.eq.s32.totalorder %s8, 0
    %p28 = por %p26, %p27
    %p29 = scmp.ne.s32.totalorder %s18, %s21
    %p30 = scmp.eq.s32.totalorder %s13, 1
    %p31 = por %p29, %p30
    %p32 = scmp.ne.s32.totalorder %s21, %s22
    %p33 = scmp.eq.s32.totalorder %s13, 0
    %p34 = por %p32, %p33
    %p35 = scmp.ne.s32.totalorder %s21, %s22
    %p36 = scmp.eq.s32.totalorder %s14, 1
    %p37 = por %p35, %p36
    %p39 = scmp.ne.s32.totalorder %s22, %s38
    %p40 = scmp.eq.s32.totalorder %s14, 0
    %p41 = por %p39, %p40
    %s43 = sadd.s32 %s42, 1
    %p46 = scmp.eq.s32.totalorder %s8, 1
    %p47 = scmp.ne.s32.totalorder %s42, %s44
    %p48 = scmp.eq.s32.totalorder %s8, 0
    %p49 = por %p47, %p48
    %p50 = scmp.ne.s32.totalorder %s42, %s44
    %p51 = scmp.eq.s32.totalorder %s13, 1
    %p52 = por %p50, %p51
    %p53 = scmp.ne.s32.totalorder %s44, %s45
    %p54 = scmp.eq.s32.totalorder %s13, 0
    %p55 = por %p53, %p54
    %p56 = scmp.ne.s32.totalorder %s44, %s45
    %p57 = scmp.eq.s32.totalorder %s14, 1
    %p58 = por %p56, %p57
    %p60 = scmp.ne.s32.totalorder %s45, %s59
    %p61 = scmp.eq.s32.totalorder %s14, 0
    %p62 = por %p60, %p61
    %s63 = ssub.s32 %s8, %s15
    %p64 = scmp.eq.s32.totalorder %s63, 0
    %s66 = sadd.s32 %s65, 1
    %s67 = scalar_select %p64, %s65, %s66
    %p70 = pneg %p64
    %p71 = scmp.eq.s32.totalorder %s8, 1
    %p72 = por %p70, %p71
    %p73 = scmp.ne.s32.totalorder %s65, %s68
    %p74 = scmp.eq.s32.totalorder %s8, 0
    %p75 = por %p73, %p74
    %p76 = scmp.ne.s32.totalorder %s65, %s68
    %p77 = scmp.eq.s32.totalorder %s13, 1
    %p78 = por %p76, %p77
    %p79 = scmp.ne.s32.totalorder %s68, %s69
    %p80 = scmp.eq.s32.totalorder %s13, 0
    %p81 = por %p79, %p80
    %p82 = scmp.ne.s32.totalorder %s68, %s69
    %p83 = scmp.eq.s32.totalorder %s14, 1
    %p84 = por %p82, %p83
    %p86 = scmp.ne.s32.totalorder %s69, %s85
    %p87 = scmp.eq.s32.totalorder %s14, 0
    %p88 = por %p86, %p87
    %p89 = scmp.le.s32.totalorder 1, %s8
    %p90 = scmp.lt.s32.totalorder %s8, 3
    %p91 = pnand %p89, %p90
    %p92 = pneg %p91
    // Predicated region
    $region9: #{mdta_forward.2} parent=5 // pred_check
      _
    $region10: #{mdta_forward.2} parent=5 // pred_check_branch
      %94 = sbr.rel (%p91) target = $region12
    $region11: #{mdta_forward.2} parent=5 // pred_region
      %s95 = ssub.s32 %s8, 1
      // Predicated region
      $region13: #{mdta_forward.2} parent=11 // pred_check
        %p96 = pneg %p55
      $region14: #{mdta_forward.2} parent=11 // pred_check_branch
        %98 = sbr.rel (%p96) target = $region16
      $region15: #{mdta_forward.2} parent=11 // pred_region
        _
      $region16: #{mdta_forward.2} parent=11 // pred_fallthru
        _
    $region12: #{mdta_forward.2} parent=5 // pred_fallthru
      _
    %p99 = scmp.lt.s32.totalorder %s8, 2
    // Predicated region
    $region17: #{mdta_forward.2} parent=5 // pred_check
      %p100 = pneg %p99
    $region18: #{mdta_forward.2} parent=5 // pred_check_branch
      %102 = sbr.rel (%p100) target = $region20
    $region19: #{mdta_forward.2} parent=5 // pred_region
      // Predicated region
      $region21: #{mdta_forward.2} parent=19 // pred_check
        %p103 = pneg %p28
      $region22: #{mdta_forward.2} parent=19 // pred_check_branch
        %105 = sbr.rel (%p103) target = $region24
      $region23: #{mdta_forward.2} parent=19 // pred_region
        %p106 = scmp.lt.s32.totalorder %s8, 1
        %s107 = scalar_select %p106, %s8, 1
        %s108 = smul.addr %s107, 3
        %s109 = smul.addr %s108, 4
        %s110 = scalar_lea.vmem %s0, %s109
      $region24: #{mdta_forward.2} parent=19 // pred_fallthru
        _
    $region20: #{mdta_forward.2} parent=5 // pred_fallthru
      _
    %p111 = scmp.le.s32.totalorder 1, %s8
    %p112 = scmp.lt.s32.totalorder %s8, 3
    %p113 = pnand %p111, %p112
    %p114 = pneg %p113
    // Predicated region
    $region25: #{mdta_forward.2} parent=5 // pred_check
      _
    $region26: #{mdta_forward.2} parent=5 // pred_check_branch
      %116 = sbr.rel (%p113) target = $region28
    $region27: #{mdta_forward.2} parent=5 // pred_region
      %s117 = ssub.s32 %s8, 1
      %p118 = scmp.lt.s32.totalorder %s13, 1
      %s119 = scalar_select %p118, %s13, 1
      %s120 = smul.addr %s119, 3
      %s121 = smul.addr %s120, 4
      %s122 = scalar_lea.vmem %s0, %s121
      %p123 = pneg %p34
      %p124 = pneg %p31
      %p125 = pneg %p55
      %p126 = pneg %p52
      %p127 = pneg %p81
      %p128 = pneg %p78
      %p129 = scmp.lt.s32.totalorder %s13, 1
      %s130 = scalar_select %p129, %s13, 1
      %s131 = smul.addr %s130, 2
      %s132 = smul.addr %s131, 8
      %s133 = scalar_lea.vmem %s2, %s132
      %p134 = scmp.lt.s32.totalorder %s13, 1
      %s135 = scalar_select %p134, %s13, 1
      %s136 = smul.addr %s135, 3
      %s137 = smul.addr %s136, 4
      %s138 = scalar_lea.vmem %s0, %s137
      %p139 = scmp.lt.s32.totalorder %s13, 1
      %s140 = scalar_select %p139, %s13, 1
      %s141 = smul.addr %s140, 2
      %s142 = smul.addr %s141, 8
      %s143 = scalar_lea.vmem %s2, %s142
      %v147 = vld [vmem:[%s138] sm:$0xff]
      %v148 = vld [vmem:[%s138 + $0x8] sm:$0xf]
      %v150 = vcombine.high %v147, %v147
      %v152 = vpack.c.bf16 %v147, %v147
      %v153 = vpack.c.bf16 %v150, %v150
      %v154 = vpack.c.bf16 %v148, %v148
      %v155 = vlaneseq
      %v156 = vand.u32 %v155, 127
      %v157 = vadd.s32 %v156, 128
      %vm158 = vcmp.lt.s32.totalorder %v156, 0
      %v159 = vsub.s32 0, %v156
      %v160 = vsel %vm158, %v159, %v156
      %v161 = vshrl.u32 %v160, 4
      %v162 = vand.u32 %v160, 15
      %v163 = vsub.s32 0, %v162
      %v164 = vsel %vm158, %v163, %v162
      %vm165 = vcmp.lt.s32.totalorder %v157, 0
      %v166 = vsub.s32 0, %v157
      %v167 = vsel %vm165, %v166, %v157
      %v168 = vshrl.u32 %v167, 4
      %v169 = vand.u32 %v167, 15
      %v170 = vsub.s32 0, %v169
      %v171 = vsel %vm165, %v170, %v169
      %vm172 = vcmp.ne.s32.totalorder %v164, 0
      %vm173 = vcmp.ne.s32.totalorder %v171, 0
      %vm174 = vcmp.lt.s32.totalorder %v164, 0
      %vm175 = vcmp.lt.s32.totalorder %v171, 0
      %vm176 = vmand %vm174, %vm172
      %vm177 = vmand %vm175, %vm173
      %v178 = vadd.s32 %v164, 16
      %v179 = vadd.s32 %v171, 16
      %v180 = vsel %vm176, %v178, %v164
      %v181 = vsel %vm177, %v179, %v171
      %vm182 = vcmp.ne.s32.totalorder %v180, 0
      %vm183 = vcmp.ne.s32.totalorder %v181, 0
      %vm184 = vcmp.ne.s32.totalorder %v180, 15
      %vm185 = vcmp.ne.s32.totalorder %v181, 15
      %v186 = vsel %vm182, 1, 0
      %v187 = vsel %vm183, 1, 0
      %vm188 = vcmp.eq.s32.totalorder %v186, 1
      %vm189 = vcmp.eq.s32.totalorder %v187, 1
      %vm190 = vmpackc.low %vm189, %vm188
      %v191 = vsel %vm190, 65537, 0
      %v192 = vlaneseq
      %v193 = vshrl.u32 %v192, 7
      %v194 = vsub.s32 0, %v193
      %v195 = vrot.slane %v191, %v194
      %v196 = vlaneseq
      %v197 = vshrl.u32 %v196, 7
      %v198 = vsub.s32 4, %v197
      %v199 = vrot.slane %v191, %v198
      %vm200 = vcmp.ne.s16.totalorder %v195, 0
      %vm201 = vcmp.ne.s16.totalorder %v199, 0
      %v202 = vsel %vm200, %v152, 0
      %v203 = vsel %vm201, %v153, 0
      %v204 = vld [vmem:[%s1] sm:$0xff]
      %v205 = vpack.c.bf16 %v204, %v204
      %s206 = scalar_lea.vmem %s1, 8
      %v207 = vld [vmem:[%s206] sm:$0xff]
      %v208 = vpack.c.bf16 %v207, %v207
      %212 = vrot.lane.b32.xlu0 %v152, 127
      %v213 = vpop.permute.xlu0 %212
      %214 = vrot.lane.b32.xlu0 %v153, 127
      %v215 = vpop.permute.xlu0 %214
      %216 = vrot.lane.b32.xlu0 %v154, 127
      %v217 = vpop.permute.xlu0 %216
      %vm218 = vcmask 1039360
      %v219 = vsel %vm218, %v213, %v215
      %v220 = vsel %vm218, %v215, %v217
      %vm221 = vcmask 31744
      %v223 = vsel %vm221, %v208, 0
      %vm225 = vcmask 1041408
      %v227 = vsel %vm225, %v219, 0
      %v230 = vsel %vm225, %v220, 0
      %232 = vmatprep.subr.bf16.mxu0 %v230
      %233 = vmatpush1.bf16.msra.mxu0 %v227
      %234 = vmatprep.subr.bf16.mxu0 0
      %235 = vmatpush1.bf16.msra.mxu0 0
      %236 = vmatprep.subr.bf16.mxu0 0
      %237 = vmatpush1.bf16.msra.mxu0 0
      %238 = vmatprep.subr.bf16.mxu0 0
      %239 = vmatpush1.bf16.msra.mxu0 0
      %240 = vmatprep.subr.bf16.mxu0 0
      %241 = vmatpush1.bf16.msra.mxu0 0
      %242 = vmatprep.subr.bf16.mxu0 0
      %243 = vmatpush1.bf16.msra.mxu0 0
      %244 = vmatprep.subr.bf16.mxu0 0
      %245 = vmatpush1.bf16.msra.mxu0 0
      %246 = vmatprep.subr.bf16.mxu0 0
      %247 = vmatpush1.bf16.msra.mxu0 0
      %248 = vmatprep.subr.bf16.mxu0 0
      %249 = vmatpush1.bf16.msra.mxu0 0
      %250 = vmatprep.subr.bf16.mxu0 0
      %251 = vmatpush1.bf16.msra.mxu0 0
      %252 = vmatprep.subr.bf16.mxu0 0
      %253 = vmatpush1.bf16.msra.mxu0 0
      %254 = vmatprep.subr.bf16.mxu0 0
      %255 = vmatpush1.bf16.msra.mxu0 0
      %256 = vmatprep.subr.bf16.mxu0 0
      %257 = vmatpush1.bf16.msra.mxu0 0
      %258 = vmatprep.subr.bf16.mxu0 0
      %259 = vmatpush1.bf16.msra.mxu0 0
      %260 = vmatprep.subr.bf16.mxu0 0
      %261 = vmatpush1.bf16.msra.mxu0 0
      %262 = vmatprep.subr.bf16.mxu0 0
      %263 = vmatpush1.bf16.msra.mxu0 0
      %264 = vmatprep.mubr.bf16.mxu0 0
      %265 = vmatmul.mubr.bf16.gmra.mrb[0].mxu0 %v223
      %v266 = vpop.f32.mrb[0].mxu0
      %v267 = vadd.f32 0.0, %v266
      %v268 = vpop.f32.mrb[0].mxu0
      %v269 = vadd.f32 0.0, %v268
      %v270 = vpop.f32.mrb[0].mxu0
      %v271 = vpop.f32.mrb[0].mxu0
      %272 = vdwg.mxu0
      %v274 = vsel %vm221, %v205, 0
      %v277 = vsel %vm225, %v202, 0
      %v280 = vsel %vm225, %v203, 0
      %282 = vmatprep.subr.bf16.mxu0 %v280
      %283 = vmatpush1.bf16.msra.mxu0 %v277
      %284 = vmatprep.subr.bf16.mxu0 0
      %285 = vmatpush1.bf16.msra.mxu0 0
      %286 = vmatprep.subr.bf16.mxu0 0
      %287 = vmatpush1.bf16.msra.mxu0 0
      %288 = vmatprep.subr.bf16.mxu0 0
      %289 = vmatpush1.bf16.msra.mxu0 0
      %290 = vmatprep.subr.bf16.mxu0 0
      %291 = vmatpush1.bf16.msra.mxu0 0
      %292 = vmatprep.subr.bf16.mxu0 0
      %293 = vmatpush1.bf16.msra.mxu0 0
      %294 = vmatprep.subr.bf16.mxu0 0
      %295 = vmatpush1.bf16.msra.mxu0 0
      %296 = vmatprep.subr.bf16.mxu0 0
      %297 = vmatpush1.bf16.msra.mxu0 0
      %298 = vmatprep.subr.bf16.mxu0 0
      %299 = vmatpush1.bf16.msra.mxu0 0
      %300 = vmatprep.subr.bf16.mxu0 0
      %301 = vmatpush1.bf16.msra.mxu0 0
      %302 = vmatprep.subr.bf16.mxu0 0
      %303 = vmatpush1.bf16.msra.mxu0 0
      %304 = vmatprep.subr.bf16.mxu0 0
      %305 = vmatpush1.bf16.msra.mxu0 0
      %306 = vmatprep.subr.bf16.mxu0 0
      %307 = vmatpush1.bf16.msra.mxu0 0
      %308 = vmatprep.subr.bf16.mxu0 0
      %309 = vmatpush1.bf16.msra.mxu0 0
      %310 = vmatprep.subr.bf16.mxu0 0
      %311 = vmatpush1.bf16.msra.mxu0 0
      %312 = vmatprep.subr.bf16.mxu0 0
      %313 = vmatpush1.bf16.msra.mxu0 0
      %314 = vmatprep.mubr.bf16.mxu0 0
      %315 = vmatmul.mubr.bf16.gmra.mrb[0].mxu0 %v274
      %v316 = vpop.f32.mrb[0].mxu0
      %v317 = vadd.f32 %v267, %v316
      %v318 = vpop.f32.mrb[0].mxu0
      %v319 = vadd.f32 %v269, %v318
      %v320 = vpop.f32.mrb[0].mxu0
      %v321 = vpop.f32.mrb[0].mxu0
      %322 = vdwg.mxu0
      %v323 = vsel %vm184, 1, 0
      %v324 = vsel %vm185, 1, 0
      %vm325 = vcmp.eq.s32.totalorder %v323, 1
      %vm326 = vcmp.eq.s32.totalorder %v324, 1
      %vm327 = vmpackc.low %vm326, %vm325
      %v328 = vsel %vm327, 65537, 0
      %v329 = vlaneseq
      %v330 = vshrl.u32 %v329, 7
      %v331 = vsub.s32 0, %v330
      %v332 = vrot.slane %v328, %v331
      %v333 = vlaneseq
      %v334 = vshrl.u32 %v333, 7
      %v335 = vsub.s32 4, %v334
      %v336 = vrot.slane %v328, %v335
      %337 = vrot.lane.b32.xlu0 %v332, 2
      %v338 = vpop.permute.xlu0 %337
      %339 = vrot.lane.b32.xlu0 %v336, 2
      %v340 = vpop.permute.xlu0 %339
      %vm341 = vcmask 15360
      %v342 = vsel %vm341, %v338, %v340
      %vm343 = vcmp.ne.s16.totalorder %v338, 0
      %vm344 = vcmp.ne.s16.totalorder %v342, 0
      %vm345 = vcmp.ne.s16.totalorder %v340, 0
      %v346 = vsel %vm343, %v152, 0
      %v347 = vsel %vm344, %v153, 0
      %v348 = vsel %vm345, %v154, 0
      %s349 = scalar_lea.vmem %s1, 16
      %v350 = vld [vmem:[%s349] sm:$0xff]
      %v351 = vpack.c.bf16 %v350, %v350
      %355 = vrot.lane.b32.xlu0 %v346, 126
      %v356 = vpop.permute.xlu0 %355
      %357 = vrot.lane.b32.xlu0 %v347, 126
      %v358 = vpop.permute.xlu0 %357
      %359 = vrot.lane.b32.xlu0 %v348, 126
      %v360 = vpop.permute.xlu0 %359
      %vm361 = vcmask 1031168
      %v362 = vsel %vm361, %v356, %v358
      %v363 = vsel %vm361, %v358, %v360
      %v365 = vsel %vm221, %v351, 0
      %v368 = vsel %vm225, %v362, 0
      %v371 = vsel %vm225, %v363, 0
      %373 = vmatprep.subr.bf16.mxu0 %v371
      %374 = vmatpush1.bf16.msra.mxu0 %v368
      %375 = vmatprep.subr.bf16.mxu0 0
      %376 = vmatpush1.bf16.msra.mxu0 0
      %377 = vmatprep.subr.bf16.mxu0 0
      %378 = vmatpush1.bf16.msra.mxu0 0
      %379 = vmatprep.subr.bf16.mxu0 0
      %380 = vmatpush1.bf16.msra.mxu0 0
      %381 = vmatprep.subr.bf16.mxu0 0
      %382 = vmatpush1.bf16.msra.mxu0 0
      %383 = vmatprep.subr.bf16.mxu0 0
      %384 = vmatpush1.bf16.msra.mxu0 0
      %385 = vmatprep.subr.bf16.mxu0 0
      %386 = vmatpush1.bf16.msra.mxu0 0
      %387 = vmatprep.subr.bf16.mxu0 0
      %388 = vmatpush1.bf16.msra.mxu0 0
      %389 = vmatprep.subr.bf16.mxu0 0
      %390 = vmatpush1.bf16.msra.mxu0 0
      %391 = vmatprep.subr.bf16.mxu0 0
      %392 = vmatpush1.bf16.msra.mxu0 0
      %393 = vmatprep.subr.bf16.mxu0 0
      %394 = vmatpush1.bf16.msra.mxu0 0
      %395 = vmatprep.subr.bf16.mxu0 0
      %396 = vmatpush1.bf16.msra.mxu0 0
      %397 = vmatprep.subr.bf16.mxu0 0
      %398 = vmatpush1.bf16.msra.mxu0 0
      %399 = vmatprep.subr.bf16.mxu0 0
      %400 = vmatpush1.bf16.msra.mxu0 0
      %401 = vmatprep.subr.bf16.mxu0 0
      %402 = vmatpush1.bf16.msra.mxu0 0
      %403 = vmatprep.subr.bf16.mxu0 0
      %404 = vmatpush1.bf16.msra.mxu0 0
      %405 = vmatprep.mubr.bf16.mxu0 0
      %406 = vmatmul.mubr.bf16.gmra.mrb[0].mxu0 %v365
      %v407 = vpop.f32.mrb[0].mxu0
      %v408 = vadd.f32 0.0, %v407
      %v409 = vpop.f32.mrb[0].mxu0
      %v410 = vadd.f32 0.0, %v409
      %v411 = vpop.f32.mrb[0].mxu0
      %v412 = vpop.f32.mrb[0].mxu0
      %413 = vdwg.mxu0
      %v414 = vadd.f32 %v317, %v408
      %v415 = vadd.f32 %v319, %v410
      %416 = vrot.lane.b32.xlu0 %v195, 16
      %v417 = vpop.permute.xlu0 %416
      %418 = vrot.lane.b32.xlu0 %v199, 16
      %v419 = vpop.permute.xlu0 %418
      %vm420 = vcmask 130048
      %v421 = vsel %vm420, %v417, %v419
      %vm422 = vcmp.ne.s16.totalorder %v417, 0
      %vm423 = vcmp.ne.s16.totalorder %v421, 0
      %vm424 = vcmp.ne.s16.totalorder %v419, 0
      %v425 = vsel %vm422, %v152, 0
      %v426 = vsel %vm423, %v153, 0
      %v427 = vsel %vm424, %v154, 0
      %s428 = scalar_lea.vmem %s1, 24
      %v429 = vld [vmem:[%s428] sm:$0xff]
      %v430 = vpack.c.bf16 %v429, %v429
      %434 = vrot.lane.b32.xlu0 %v425, 112
      %v435 = vpop.permute.xlu0 %434
      %436 = vrot.lane.b32.xlu0 %v426, 112
      %v437 = vpop.permute.xlu0 %436
      %438 = vrot.lane.b32.xlu0 %v427, 112
      %v439 = vpop.permute.xlu0 %438
      %vm440 = vcmask 916480
      %v441 = vsel %vm440, %v435, %v437
      %v442 = vsel %vm440, %v437, %v439
      %v444 = vsel %vm221, %v430, 0
      %v447 = vsel %vm225, %v441, 0
      %v450 = vsel %vm225, %v442, 0
      %452 = vmatprep.subr.bf16.mxu0 %v450
      %453 = vmatpush1.bf16.msra.mxu0 %v447
      %454 = vmatprep.subr.bf16.mxu0 0
      %455 = vmatpush1.bf16.msra.mxu0 0
      %456 = vmatprep.subr.bf16.mxu0 0
      %457 = vmatpush1.bf16.msra.mxu0 0
      %458 = vmatprep.subr.bf16.mxu0 0
      %459 = vmatpush1.bf16.msra.mxu0 0
      %460 = vmatprep.subr.bf16.mxu0 0
      %461 = vmatpush1.bf16.msra.mxu0 0
      %462 = vmatprep.subr.bf16.mxu0 0
      %463 = vmatpush1.bf16.msra.mxu0 0
      %464 = vmatprep.subr.bf16.mxu0 0
      %465 = vmatpush1.bf16.msra.mxu0 0
      %466 = vmatprep.subr.bf16.mxu0 0
      %467 = vmatpush1.bf16.msra.mxu0 0
      %468 = vmatprep.subr.bf16.mxu0 0
      %469 = vmatpush1.bf16.msra.mxu0 0
      %470 = vmatprep.subr.bf16.mxu0 0
      %471 = vmatpush1.bf16.msra.mxu0 0
      %472 = vmatprep.subr.bf16.mxu0 0
      %473 = vmatpush1.bf16.msra.mxu0 0
      %474 = vmatprep.subr.bf16.mxu0 0
      %475 = vmatpush1.bf16.msra.mxu0 0
      %476 = vmatprep.subr.bf16.mxu0 0
      %477 = vmatpush1.bf16.msra.mxu0 0
      %478 = vmatprep.subr.bf16.mxu0 0
      %479 = vmatpush1.bf16.msra.mxu0 0
      %480 = vmatprep.subr.bf16.mxu0 0
      %481 = vmatpush1.bf16.msra.mxu0 0
      %482 = vmatprep.subr.bf16.mxu0 0
      %483 = vmatpush1.bf16.msra.mxu0 0
      %484 = vmatprep.mubr.bf16.mxu0 0
      %485 = vmatmul.mubr.bf16.gmra.mrb[0].mxu0 %v444
      %v486 = vpop.f32.mrb[0].mxu0
      %v487 = vadd.f32 0.0, %v486
      %v488 = vpop.f32.mrb[0].mxu0
      %v489 = vadd.f32 0.0, %v488
      %v490 = vpop.f32.mrb[0].mxu0
      %v491 = vpop.f32.mrb[0].mxu0
      %492 = vdwg.mxu0
      %v493 = vadd.f32 %v414, %v487
      %v494 = vadd.f32 %v415, %v489
      %s495 = scalar_lea.vmem %s1, 32
      %v496 = vld [vmem:[%s495] sm:$0xff]
      %v497 = vpack.c.bf16 %v496, %v496
      %498 = vrot.lane.b32.xlu0 %v152, 111
      %v499 = vpop.permute.xlu0 %498
      %500 = vrot.lane.b32.xlu0 %v153, 111
      %v501 = vpop.permute.xlu0 %500
      %502 = vrot.lane.b32.xlu0 %v154, 111
      %v503 = vpop.permute.xlu0 %502
      %vm504 = vcmask 908288
      %v505 = vsel %vm504, %v499, %v501
      %v506 = vsel %vm504, %v501, %v503
      %v508 = vsel %vm221, %v497, 0
      %v511 = vsel %vm225, %v505, 0
      %v514 = vsel %vm225, %v506, 0
      %516 = vmatprep.subr.bf16.mxu0 %v514
      %517 = vmatpush1.bf16.msra.mxu0 %v511
      %518 = vmatprep.subr.bf16.mxu0 0
      %519 = vmatpush1.bf16.msra.mxu0 0
      %520 = vmatprep.subr.bf16.mxu0 0
      %521 = vmatpush1.bf16.msra.mxu0 0
      %522 = vmatprep.subr.bf16.mxu0 0
      %523 = vmatpush1.bf16.msra.mxu0 0
      %524 = vmatprep.subr.bf16.mxu0 0
      %525 = vmatpush1.bf16.msra.mxu0 0
      %526 = vmatprep.subr.bf16.mxu0 0
      %527 = vmatpush1.bf16.msra.mxu0 0
      %528 = vmatprep.subr.bf16.mxu0 0
      %529 = vmatpush1.bf16.msra.mxu0 0
      %530 = vmatprep.subr.bf16.mxu0 0
      %531 = vmatpush1.bf16.msra.mxu0 0
      %532 = vmatprep.subr.bf16.mxu0 0
      %533 = vmatpush1.bf16.msra.mxu0 0
      %534 = vmatprep.subr.bf16.mxu0 0
      %535 = vmatpush1.bf16.msra.mxu0 0
      %536 = vmatprep.subr.bf16.mxu0 0
      %537 = vmatpush1.bf16.msra.mxu0 0
      %538 = vmatprep.subr.bf16.mxu0 0
      %539 = vmatpush1.bf16.msra.mxu0 0
      %540 = vmatprep.subr.bf16.mxu0 0
      %541 = vmatpush1.bf16.msra.mxu0 0
      %542 = vmatprep.subr.bf16.mxu0 0
      %543 = vmatpush1.bf16.msra.mxu0 0
      %544 = vmatprep.subr.bf16.mxu0 0
      %545 = vmatpush1.bf16.msra.mxu0 0
      %546 = vmatprep.subr.bf16.mxu0 0
      %547 = vmatpush1.bf16.msra.mxu0 0
      %548 = vmatprep.mubr.bf16.mxu0 0
      %549 = vmatmul.mubr.bf16.gmra.mrb[0].mxu0 %v508
      %v550 = vpop.f32.mrb[0].mxu0
      %v551 = vadd.f32 0.0, %v550
      %v552 = vpop.f32.mrb[0].mxu0
      %v553 = vadd.f32 0.0, %v552
      %v554 = vpop.f32.mrb[0].mxu0
      %v555 = vpop.f32.mrb[0].mxu0
      %556 = vdwg.mxu0
      %v557 = vadd.f32 %v493, %v551
      %v558 = vadd.f32 %v494, %v553
      %559 = vrot.lane.b32.xlu0 %v332, 18
      %v560 = vpop.permute.xlu0 %559
      %561 = vrot.lane.b32.xlu0 %v336, 18
      %v562 = vpop.permute.xlu0 %561
      %vm563 = vcmask 146432
      %v564 = vsel %vm563, %v560, %v562
      %vm565 = vcmp.ne.s16.totalorder %v560, 0
      %vm566 = vcmp.ne.s16.totalorder %v564, 0
      %vm567 = vcmp.ne.s16.totalorder %v562, 0
      %v568 = vsel %vm565, %v152, 0
      %v569 = vsel %vm566, %v153, 0
      %v570 = vsel %vm567, %v154, 0
      %s571 = scalar_lea.vmem %s1, 40
      %v572 = vld [vmem:[%s571] sm:$0xff]
      %v573 = vpack.c.bf16 %v572, %v572
      %577 = vrot.lane.b32.xlu0 %v568, 110
      %v578 = vpop.permute.xlu0 %577
      %579 = vrot.lane.b32.xlu0 %v569, 110
      %v580 = vpop.permute.xlu0 %579
      %581 = vrot.lane.b32.xlu0 %v570, 110
      %v582 = vpop.permute.xlu0 %581
      %vm583 = vcmask 900096
      %v584 = vsel %vm583, %v578, %v580
      %v585 = vsel %vm583, %v580, %v582
      %v587 = vsel %vm221, %v573, 0
      %v590 = vsel %vm225, %v584, 0
      %v593 = vsel %vm225, %v585, 0
      %595 = vmatprep.subr.bf16.mxu0 %v593
      %596 = vmatpush1.bf16.msra.mxu0 %v590
      %597 = vmatprep.subr.bf16.mxu0 0
      %598 = vmatpush1.bf16.msra.mxu0 0
      %599 = vmatprep.subr.bf16.mxu0 0
      %600 = vmatpush1.bf16.msra.mxu0 0
      %601 = vmatprep.subr.bf16.mxu0 0
      %602 = vmatpush1.bf16.msra.mxu0 0
      %603 = vmatprep.subr.bf16.mxu0 0
      %604 = vmatpush1.bf16.msra.mxu0 0
      %605 = vmatprep.subr.bf16.mxu0 0
      %606 = vmatpush1.bf16.msra.mxu0 0
      %607 = vmatprep.subr.bf16.mxu0 0
      %608 = vmatpush1.bf16.msra.mxu0 0
      %609 = vmatprep.subr.bf16.mxu0 0
      %610 = vmatpush1.bf16.msra.mxu0 0
      %611 = vmatprep.subr.bf16.mxu0 0
      %612 = vmatpush1.bf16.msra.mxu0 0
      %613 = vmatprep.subr.bf16.mxu0 0
      %614 = vmatpush1.bf16.msra.mxu0 0
      %615 = vmatprep.subr.bf16.mxu0 0
      %616 = vmatpush1.bf16.msra.mxu0 0
      %617 = vmatprep.subr.bf16.mxu0 0
      %618 = vmatpush1.bf16.msra.mxu0 0
      %619 = vmatprep.subr.bf16.mxu0 0
      %620 = vmatpush1.bf16.msra.mxu0 0
      %621 = vmatprep.subr.bf16.mxu0 0
      %622 = vmatpush1.bf16.msra.mxu0 0
      %623 = vmatprep.subr.bf16.mxu0 0
      %624 = vmatpush1.bf16.msra.mxu0 0
      %625 = vmatprep.subr.bf16.mxu0 0
      %626 = vmatpush1.bf16.msra.mxu0 0
      %627 = vmatprep.mubr.bf16.mxu0 0
      %628 = vmatmul.mubr.bf16.gmra.mrb[0].mxu0 %v587
      %v629 = vpop.f32.mrb[0].mxu0
      %v630 = vadd.f32 0.0, %v629
      %v631 = vpop.f32.mrb[0].mxu0
      %v632 = vadd.f32 0.0, %v631
      %v633 = vpop.f32.mrb[0].mxu0
      %v634 = vpop.f32.mrb[0].mxu0
      %635 = vdwg.mxu0
      %v636 = vadd.f32 %v557, %v630
      %v637 = vadd.f32 %v558, %v632
      %638 = vrot.lane.b32.xlu0 %v195, 32
      %v639 = vpop.permute.xlu0 %638
      %640 = vrot.lane.b32.xlu0 %v199, 32
      %v641 = vpop.permute.xlu0 %640
      %vm642 = vcmask 261120
      %v643 = vsel %vm642, %v639, %v641
      %vm644 = vcmp.ne.s16.totalorder %v639, 0
      %vm645 = vcmp.ne.s16.totalorder %v643, 0
      %vm646 = vcmp.ne.s16.totalorder %v641, 0
      %v647 = vsel %vm644, %v152, 0
      %v648 = vsel %vm645, %v153, 0
      %v649 = vsel %vm646, %v154, 0
      %s650 = scalar_lea.vmem %s1, 48
      %v651 = vld [vmem:[%s650] sm:$0xff]
      %v652 = vpack.c.bf16 %v651, %v651
      %656 = vrot.lane.b32.xlu0 %v647, 96
      %v657 = vpop.permute.xlu0 %656
      %658 = vrot.lane.b32.xlu0 %v648, 96
      %v659 = vpop.permute.xlu0 %658
      %660 = vrot.lane.b32.xlu0 %v649, 96
      %v661 = vpop.permute.xlu0 %660
      %vm662 = vcmask 785408
      %v663 = vsel %vm662, %v657, %v659
      %v664 = vsel %vm662, %v659, %v661
      %v666 = vsel %vm221, %v652, 0
      %v669 = vsel %vm225, %v663, 0
      %v672 = vsel %vm225, %v664, 0
      %674 = vmatprep.subr.bf16.mxu0 %v672
      %675 = vmatpush1.bf16.msra.mxu0 %v669
      %676 = vmatprep.subr.bf16.mxu0 0
      %677 = vmatpush1.bf16.msra.mxu0 0
      %678 = vmatprep.subr.bf16.mxu0 0
      %679 = vmatpush1.bf16.msra.mxu0 0
      %680 = vmatprep.subr.bf16.mxu0 0
      %681 = vmatpush1.bf16.msra.mxu0 0
      %682 = vmatprep.subr.bf16.mxu0 0
      %683 = vmatpush1.bf16.msra.mxu0 0
      %684 = vmatprep.subr.bf16.mxu0 0
      %685 = vmatpush1.bf16.msra.mxu0 0
      %686 = vmatprep.subr.bf16.mxu0 0
      %687 = vmatpush1.bf16.msra.mxu0 0
      %688 = vmatprep.subr.bf16.mxu0 0
      %689 = vmatpush1.bf16.msra.mxu0 0
      %690 = vmatprep.subr.bf16.mxu0 0
      %691 = vmatpush1.bf16.msra.mxu0 0
      %692 = vmatprep.subr.bf16.mxu0 0
      %693 = vmatpush1.bf16.msra.mxu0 0
      %694 = vmatprep.subr.bf16.mxu0 0
      %695 = vmatpush1.bf16.msra.mxu0 0
      %696 = vmatprep.subr.bf16.mxu0 0
      %697 = vmatpush1.bf16.msra.mxu0 0
      %698 = vmatprep.subr.bf16.mxu0 0
      %699 = vmatpush1.bf16.msra.mxu0 0
      %700 = vmatprep.subr.bf16.mxu0 0
      %701 = vmatpush1.bf16.msra.mxu0 0
      %702 = vmatprep.subr.bf16.mxu0 0
      %703 = vmatpush1.bf16.msra.mxu0 0
      %704 = vmatprep.subr.bf16.mxu0 0
      %705 = vmatpush1.bf16.msra.mxu0 0
      %706 = vmatprep.mubr.bf16.mxu0 0
      %707 = vmatmul.mubr.bf16.gmra.mrb[0].mxu0 %v666
      %v708 = vpop.f32.mrb[0].mxu0
      %v709 = vadd.f32 0.0, %v708
      %v710 = vpop.f32.mrb[0].mxu0
      %v711 = vadd.f32 0.0, %v710
      %v712 = vpop.f32.mrb[0].mxu0
      %v713 = vpop.f32.mrb[0].mxu0
      %714 = vdwg.mxu0
      %v715 = vadd.f32 %v636, %v709
      %v716 = vadd.f32 %v637, %v711
      %s717 = scalar_lea.vmem %s1, 56
      %v718 = vld [vmem:[%s717] sm:$0xff]
      %v719 = vpack.c.bf16 %v718, %v718
      %720 = vrot.lane.b32.xlu0 %v152, 95
      %v721 = vpop.permute.xlu0 %720
      %722 = vrot.lane.b32.xlu0 %v153, 95
      %v723 = vpop.permute.xlu0 %722
      %724 = vrot.lane.b32.xlu0 %v154, 95
      %v725 = vpop.permute.xlu0 %724
      %vm726 = vcmask 777216
      %v727 = vsel %vm726, %v721, %v723
      %v728 = vsel %vm726, %v723, %v725
      %v730 = vsel %vm221, %v719, 0
      %v733 = vsel %vm225, %v727, 0
      %v736 = vsel %vm225, %v728, 0
      %738 = vmatprep.subr.bf16.mxu0 %v736
      %739 = vmatpush1.bf16.msra.mxu0 %v733
      %740 = vmatprep.subr.bf16.mxu0 0
      %741 = vmatpush1.bf16.msra.mxu0 0
      %742 = vmatprep.subr.bf16.mxu0 0
      %743 = vmatpush1.bf16.msra.mxu0 0
      %744 = vmatprep.subr.bf16.mxu0 0
      %745 = vmatpush1.bf16.msra.mxu0 0
      %746 = vmatprep.subr.bf16.mxu0 0
      %747 = vmatpush1.bf16.msra.mxu0 0
      %748 = vmatprep.subr.bf16.mxu0 0
      %749 = vmatpush1.bf16.msra.mxu0 0
      %750 = vmatprep.subr.bf16.mxu0 0
      %751 = vmatpush1.bf16.msra.mxu0 0
      %752 = vmatprep.subr.bf16.mxu0 0
      %753 = vmatpush1.bf16.msra.mxu0 0
      %754 = vmatprep.subr.bf16.mxu0 0
      %755 = vmatpush1.bf16.msra.mxu0 0
      %756 = vmatprep.subr.bf16.mxu0 0
      %757 = vmatpush1.bf16.msra.mxu0 0
      %758 = vmatprep.subr.bf16.mxu0 0
      %759 = vmatpush1.bf16.msra.mxu0 0
      %760 = vmatprep.subr.bf16.mxu0 0
      %761 = vmatpush1.bf16.msra.mxu0 0
      %762 = vmatprep.subr.bf16.mxu0 0
      %763 = vmatpush1.bf16.msra.mxu0 0
      %764 = vmatprep.subr.bf16.mxu0 0
      %765 = vmatpush1.bf16.msra.mxu0 0
      %766 = vmatprep.subr.bf16.mxu0 0
      %767 = vmatpush1.bf16.msra.mxu0 0
      %768 = vmatprep.subr.bf16.mxu0 0
      %769 = vmatpush1.bf16.msra.mxu0 0
      %770 = vmatprep.mubr.bf16.mxu0 0
      %771 = vmatmul.mubr.bf16.gmra.mrb[0].mxu0 %v730
      %v772 = vpop.f32.mrb[0].mxu0
      %v773 = vadd.f32 0.0, %v772
      %v774 = vpop.f32.mrb[0].mxu0
      %v775 = vadd.f32 0.0, %v774
      %v776 = vpop.f32.mrb[0].mxu0
      %v777 = vpop.f32.mrb[0].mxu0
      %778 = vdwg.mxu0
      %v779 = vadd.f32 %v715, %v773
      %v780 = vadd.f32 %v716, %v775
      %781 = vrot.lane.b32.xlu0 %v332, 34
      %v782 = vpop.permute.xlu0 %781
      %783 = vrot.lane.b32.xlu0 %v336, 34
      %v784 = vpop.permute.xlu0 %783
      %vm785 = vcmask 277504
      %v786 = vsel %vm785, %v782, %v784
      %vm787 = vcmp.ne.s16.totalorder %v782, 0
      %vm788 = vcmp.ne.s16.totalorder %v786, 0
      %vm789 = vcmp.ne.s16.totalorder %v784, 0
      %v790 = vsel %vm787, %v152, 0
      %v791 = vsel %vm788, %v153, 0
      %v792 = vsel %vm789, %v154, 0
      %s793 = scalar_lea.vmem %s1, 64
      %v794 = vld [vmem:[%s793] sm:$0xff]
      %v795 = vpack.c.bf16 %v794, %v794
      %799 = vrot.lane.b32.xlu0 %v790, 94
      %v800 = vpop.permute.xlu0 %799
      %801 = vrot.lane.b32.xlu0 %v791, 94
      %v802 = vpop.permute.xlu0 %801
      %803 = vrot.lane.b32.xlu0 %v792, 94
      %v804 = vpop.permute.xlu0 %803
      %vm805 = vcmask 769024
      %v806 = vsel %vm805, %v800, %v802
      %v807 = vsel %vm805, %v802, %v804
      %v809 = vsel %vm221, %v795, 0
      %v812 = vsel %vm225, %v806, 0
      %v815 = vsel %vm225, %v807, 0
      %817 = vmatprep.subr.bf16.mxu0 %v815
      %818 = vmatpush1.bf16.msra.mxu0 %v812
      %819 = vmatprep.subr.bf16.mxu0 0
      %820 = vmatpush1.bf16.msra.mxu0 0
      %821 = vmatprep.subr.bf16.mxu0 0
      %822 = vmatpush1.bf16.msra.mxu0 0
      %823 = vmatprep.subr.bf16.mxu0 0
      %824 = vmatpush1.bf16.msra.mxu0 0
      %825 = vmatprep.subr.bf16.mxu0 0
      %826 = vmatpush1.bf16.msra.mxu0 0
      %827 = vmatprep.subr.bf16.mxu0 0
      %828 = vmatpush1.bf16.msra.mxu0 0
      %829 = vmatprep.subr.bf16.mxu0 0
      %830 = vmatpush1.bf16.msra.mxu0 0
      %831 = vmatprep.subr.bf16.mxu0 0
      %832 = vmatpush1.bf16.msra.mxu0 0
      %833 = vmatprep.subr.bf16.mxu0 0
      %834 = vmatpush1.bf16.msra.mxu0 0
      %835 = vmatprep.subr.bf16.mxu0 0
      %836 = vmatpush1.bf16.msra.mxu0 0
      %837 = vmatprep.subr.bf16.mxu0 0
      %838 = vmatpush1.bf16.msra.mxu0 0
      %839 = vmatprep.subr.bf16.mxu0 0
      %840 = vmatpush1.bf16.msra.mxu0 0
      %841 = vmatprep.subr.bf16.mxu0 0
      %842 = vmatpush1.bf16.msra.mxu0 0
      %843 = vmatprep.subr.bf16.mxu0 0
      %844 = vmatpush1.bf16.msra.mxu0 0
      %845 = vmatprep.subr.bf16.mxu0 0
      %846 = vmatpush1.bf16.msra.mxu0 0
      %847 = vmatprep.subr.bf16.mxu0 0
      %848 = vmatpush1.bf16.msra.mxu0 0
      %849 = vmatprep.mubr.bf16.mxu0 0
      %850 = vmatmul.mubr.bf16.gmra.mrb[0].mxu0 %v809
      %v851 = vpop.f32.mrb[0].mxu0
      %v852 = vadd.f32 0.0, %v851
      %v853 = vpop.f32.mrb[0].mxu0
      %v854 = vadd.f32 0.0, %v853
      %v855 = vpop.f32.mrb[0].mxu0
      %v856 = vpop.f32.mrb[0].mxu0
      %857 = vdwg.mxu0
      %v858 = vadd.f32 %v779, %v852
      %v859 = vadd.f32 %v780, %v854
      %860 = vst [vmem:[%s143] sm:$0xff] %v858
      %861 = vst [vmem:[%s143 + $0x8] sm:$0xff] %v859
      %p862 = scmp.lt.s32.totalorder %s13, 1
      %s863 = scalar_select %p862, %s13, 1
      %s864 = smul.addr %s863, 2
      %s865 = smul.addr %s864, 8
      %s866 = scalar_lea.vmem %s2, %s865
      // Predicated region
      $region29: #{mdta_forward.2} parent=27 // pred_check
        %p867 = pneg %p78
      $region30: #{mdta_forward.2} parent=27 // pred_check_branch
        %869 = sbr.rel (%p867) target = $region32
      $region31: #{mdta_forward.2} parent=27 // pred_region
        _
      $region32: #{mdta_forward.2} parent=27 // pred_fallthru
        _
    $region28: #{mdta_forward.2} parent=5 // pred_fallthru
      _
    %p870 = scmp.le.s32.totalorder 2, %s8
    // Predicated region
    $region33: #{mdta_forward.2} parent=5 // pred_check
      %p871 = pneg %p870
    $region34: #{mdta_forward.2} parent=5 // pred_check_branch
      %873 = sbr.rel (%p871) target = $region36
    $region35: #{mdta_forward.2} parent=5 // pred_region
      %s874 = ssub.s32 %s8, 2
      // Predicated region
      $region37: #{mdta_forward.2} parent=35 // pred_check
        %p875 = pneg %p84
      $region38: #{mdta_forward.2} parent=35 // pred_check_branch
        %877 = sbr.rel (%p875) target = $region40
      $region39: #{mdta_forward.2} parent=35 // pred_region
        %p878 = scmp.lt.s32.totalorder %s14, 1
        %s879 = scalar_select %p878, %s14, 1
        %s880 = smul.addr %s879, 2
        %s881 = smul.addr %s880, 8
        %s882 = scalar_lea.vmem %s2, %s881
      $region40: #{mdta_forward.2} parent=35 // pred_fallthru
        _
    $region36: #{mdta_forward.2} parent=5 // pred_fallthru
      _
  $region6: #{mdta_forward.2} parent=0 // loop_footer
    %s12 = sadd.s32 1, %s8
  $region7: #{mdta_forward.2} parent=0 // loop_footer_branch
    %7 = sbr.rel target = $region3
  $region8: #{mdta_forward.2} parent=0 // loop_exit
    _

</llo_original>
